<compile_context>
chip_gen: v6e
topology: v6e:2x2x1
jax: 0.10.0
libtpu: 0.0.40
codegen_flags: <defaults>
</compile_context>

<pallas_src>
import functools

import jax
import jax.numpy as jnp
import numpy as np
from jax.experimental import pallas as pl
from jax.experimental.pallas import tpu as pltpu

LANE = 128


def _round_up(v, m):
    return (v + m - 1) // m * m


def _conv1_shifts(s):
    """Spatial-shift set of the polyphase decomposition of a 3x3/stride-s conv."""
    ds = sorted({(k - 1) // s for k in range(3)})
    return tuple((dh, dw) for dh in ds for dw in ds)


# --------------------------------------------------------------------------- #
# Kernel
# --------------------------------------------------------------------------- #
def _resblock_kernel(*refs, Nb, Ho, Wo, Cin_p, Cout_p, shifts, fold_shortcut):
    """One grid step processes Nb images.

    fold_shortcut=True  (stride > 1):
        refs = (x, w1col, b1, w2col, b2, out)
    fold_shortcut=False (stride == 1, identity skip):
        refs = (x, res, w1col, b1, w2col, b2, out)

    x   : (Nb, Ho+2, Wo+2, Cin_p)  polyphase input, zero halo, bf16
    res : (Nb, Ho, Wo, Cout_p)     original-precision residual (identity path)
    w1col: (T1*Cin_p, Cout_p) bf16 ; w2col: (9*Cout_p [+Cin_p], Cout_p) bf16
    b*  : (1, Cout_p) f32
    out : (Nb, Ho, Wo, Cout_p)
    """
    if fold_shortcut:
        x_ref, w1_ref, b1_ref, w2_ref, b2_ref, out_ref = refs
        res_ref = None
    else:
        x_ref, res_ref, w1_ref, b1_ref, w2_ref, b2_ref, out_ref = refs

    M = Nb * Ho * Wo
    T1 = len(shifts)

    # ---- conv1: im2col along K -> ONE MXU matmul (K = T1 * Cin_p) ----
    x_center = x_ref[:, 1:1 + Ho, 1:1 + Wo, :]          # reused by the shortcut
    cols1 = []
    for (dh, dw) in shifts:
        if (dh, dw) == (0, 0):
            cols1.append(x_center)
        else:
            cols1.append(x_ref[:, 1 + dh:1 + dh + Ho, 1 + dw:1 + dw + Wo, :])
    xcol = jnp.concatenate(cols1, axis=-1).reshape(M, T1 * Cin_p)
    h1 = jnp.dot(xcol, w1_ref[...], preferred_element_type=jnp.float32)
    h1 = jnp.maximum(h1 + b1_ref[...], 0.0)             # f32 bias+ReLU (v5e-safe)

    # ---- conv2 (+ folded 1x1/stride-s shortcut): ONE MXU matmul ----
    # Pad the conv1 activation by a zero halo as a value (no persistent scratch,
    # so there is no per-core halo-initialization hazard on v7x megacore).
    h1b = h1.astype(jnp.bfloat16).reshape(Nb, Ho, Wo, Cout_p)
    zrow = jnp.zeros((Nb, 1, Wo, Cout_p), jnp.bfloat16)
    zcol = jnp.zeros((Nb, Ho + 2, 1, Cout_p), jnp.bfloat16)
    h1p = jnp.concatenate([zrow, h1b, zrow], axis=1)
    h1p = jnp.concatenate([zcol, h1p, zcol], axis=2)

    cols2 = [h1p[:, kh:kh + Ho, kw:kw + Wo, :]
             for kh in range(3) for kw in range(3)]
    if fold_shortcut:
        cols2.append(x_center)        # projection shortcut folded into K
    h1col = jnp.concatenate(cols2, axis=-1).reshape(M, -1)

    out = jnp.dot(h1col, w2_ref[...], preferred_element_type=jnp.float32)
    out = out + b2_ref[...]           # conv2 bias (+ shortcut bias if folded)
    if res_ref is not None:
        out = out + res_ref[...].reshape(M, Cout_p)     # identity skip, full f32
    out = jnp.maximum(out, 0.0)
    out_ref[...] = out.reshape(Nb, Ho, Wo, Cout_p).astype(out_ref.dtype)


# --------------------------------------------------------------------------- #
# One-time host-side parameter packing (numpy, cached by the caller)
# --------------------------------------------------------------------------- #
def pack_resblock_params(w1, b1, w2, b2, ws, bs, *, stride):
    """Repack HWIO weights once into K-concatenated, lane-padded MXU matrices."""
    s = int(stride)
    w1 = np.asarray(w1, np.float32)
    w2 = np.asarray(w2, np.float32)
    ws = np.asarray(ws, np.float32)
    _, _, Cin, Cout = w1.shape
    Cpoly = s * s * Cin
    Cin_p = _round_up(Cpoly, LANE)
    Cout_p = _round_up(Cout, LANE)
    shifts = _conv1_shifts(s)
    T1 = len(shifts)
    fold_shortcut = s > 1

    # conv1: rows grouped [tap t][polyphase phase (ph,pw)][ci]
    w1col = np.zeros((T1 * Cin_p, Cout_p), np.float32)
    for kh in range(3):
        dh, ph = divmod(kh - 1, s)
        for kw in range(3):
            dw, pw = divmod(kw - 1, s)
            t = shifts.index((dh, dw))
            row = t * Cin_p + (ph * s + pw) * Cin
            w1col[row:row + Cin, :Cout] = w1[kh, kw]

    # conv2 (+ appended 1x1 shortcut rows when stride > 1)
    K2 = 9 * Cout_p + (Cin_p if fold_shortcut else 0)
    w2col = np.zeros((K2, Cout_p), np.float32)
    for kh in range(3):
        for kw in range(3):
            u = kh * 3 + kw
            w2col[u * Cout_p:u * Cout_p + Cout, :Cout] = w2[kh, kw]
    b2f = np.asarray(b2, np.float32).reshape(-1).copy()
    if fold_shortcut:
        w2col[9 * Cout_p:9 * Cout_p + Cin, :Cout] = ws
        b2f = b2f + np.asarray(bs, np.float32).reshape(-1)

    b1p = np.zeros((1, Cout_p), np.float32)
    b1p[0, :Cout] = np.asarray(b1, np.float32).reshape(-1)
    b2p = np.zeros((1, Cout_p), np.float32)
    b2p[0, :Cout] = b2f

    packed = dict(w1col=jnp.asarray(w1col, jnp.bfloat16),
                  b1=jnp.asarray(b1p),
                  w2col=jnp.asarray(w2col, jnp.bfloat16),
                  b2=jnp.asarray(b2p))
    meta = dict(stride=s, cout=int(Cout))
    return packed, meta


# --------------------------------------------------------------------------- #
# Per-call (jitted) path
# --------------------------------------------------------------------------- #
def _choose_batch_block(N, Ho, Wo, Cin_p, Cout_p, T1, K2, out_bytes):
    TARGET_ROWS = 2048                      # matmul M rows per grid step
    VMEM_BUDGET = 28 * 1024 * 1024          # conservative; fits v7x 64 MiB VMEM

    def step_bytes(nb):
        M = nb * Ho * Wo
        x_blk = nb * (Ho + 2) * (Wo + 2) * Cin_p * 2
        o_blk = nb * Ho * Wo * Cout_p * out_bytes
        w_b = (T1 * Cin_p + K2 + 2) * Cout_p * 2
        interm = M * (T1 * Cin_p * 2 + K2 * 2 + 2 * Cout_p * 4)
        return 2 * (x_blk + o_blk) + 2 * w_b + interm

    best = 1
    for nb in range(1, N + 1):
        if N % nb:
            continue
        if N >= 2 and N // nb < 2:
            continue                        # keep >=2 grid steps (v7x dual-TC)
        if nb > 1 and (nb * Ho * Wo > TARGET_ROWS or step_bytes(nb) > VMEM_BUDGET):
            continue
        best = nb
    return best


@functools.partial(jax.jit, static_argnames=("stride", "cout"))
def _resblock_apply(x_nhwc, w1col, b1, w2col, b2, *, stride, cout):
    s = stride
    N, H, W, Cin = x_nhwc.shape
    assert H % s == 0 and W % s == 0, "spatial dims must be divisible by stride"
    Ho, Wo = H // s, W // s
    shifts = _conv1_shifts(s)
    T1 = len(shifts)
    fold_shortcut = s > 1
    if not fold_shortcut:
        assert Cin == cout, "identity shortcut requires Cin == Cout"

    Cout_p = w1col.shape[1]
    Cin_p = w1col.shape[0] // T1
    K2 = w2col.shape[0]
    Cpoly = s * s * Cin

    # Polyphase (space-to-depth) layout so every in-kernel access is a plain
    # unit-stride slice; bf16 cast halves kernel input bandwidth. Kept inside
    # jit so XLA can fuse it with the producer of x.
    xp = x_nhwc.reshape(N, Ho, s, Wo, s, Cin).transpose(0, 1, 3, 2, 4, 5)
    xp = xp.reshape(N, Ho, Wo, Cpoly)
    xp = jnp.pad(xp, ((0, 0), (1, 1), (1, 1), (0, Cin_p - Cpoly)))
    xp = xp.astype(jnp.bfloat16)

    inputs = [xp]
    in_specs = [pl.BlockSpec((None, Ho + 2, Wo + 2, Cin_p), None)]  # placeholder
    if not fold_shortcut:
        # identity residual at full input precision (matches PyTorch semantics)
        res = jnp.pad(x_nhwc, ((0, 0), (0, 0), (0, 0), (0, Cout_p - Cin)))
        inputs.append(res)
    inputs += [w1col, b1, w2col, b2]

    out_bytes = jnp.dtype(x_nhwc.dtype).itemsize
    Nb = _choose_batch_block(N, Ho, Wo, Cin_p, Cout_p, T1, K2, out_bytes)
    grid = (N // Nb,)

    in_specs = [pl.BlockSpec((Nb, Ho + 2, Wo + 2, Cin_p), lambda b: (b, 0, 0, 0))]
    if not fold_shortcut:
        in_specs.append(pl.BlockSpec((Nb, Ho, Wo, Cout_p), lambda b: (b, 0, 0, 0)))
    in_specs += [
        pl.BlockSpec((T1 * Cin_p, Cout_p), lambda b: (0, 0)),
        pl.BlockSpec((1, Cout_p), lambda b: (0, 0)),
        pl.BlockSpec((K2, Cout_p), lambda b: (0, 0)),
        pl.BlockSpec((1, Cout_p), lambda b: (0, 0)),
    ]
    out_spec = pl.BlockSpec((Nb, Ho, Wo, Cout_p), lambda b: (b, 0, 0, 0))

    kernel = functools.partial(
        _resblock_kernel, Nb=Nb, Ho=Ho, Wo=Wo, Cin_p=Cin_p, Cout_p=Cout_p,
        shifts=shifts, fold_shortcut=fold_shortcut)

    M_total = N * Ho * Wo
    flops = 2 * M_total * (T1 * Cin_p + K2) * Cout_p
    bytes_accessed = (xp.size * 2 + (w1col.size + w2col.size) * 2
                      + (b1.size + b2.size) * 4 + M_total * Cout_p * out_bytes)
    if not fold_shortcut:
        bytes_accessed += inputs[1].size * out_bytes

    out_p = pl.pallas_call(
        kernel,
        out_shape=jax.ShapeDtypeStruct((N, Ho, Wo, Cout_p), x_nhwc.dtype),
        grid_spec=pltpu.PrefetchScalarGridSpec(
            num_scalar_prefetch=0,
            grid=grid,
            in_specs=in_specs,
            out_specs=out_spec,
        ),
        compiler_params=pltpu.CompilerParams(
            dimension_semantics=("parallel",),
            vmem_limit_bytes=48 * 1024 * 1024),
        cost_estimate=pl.CostEstimate(flops=int(flops), transcendentals=0,
                                      bytes_accessed=int(bytes_accessed)),
    )(*inputs)

    return out_p[..., :cout]   # drop lane padding


def resblock_forward(x_nhwc, packed, meta):
    return _resblock_apply(x_nhwc, packed["w1col"], packed["b1"],
                           packed["w2col"], packed["b2"], **meta)


# --------------------------------------------------------------------------- #
# Pure-JAX reference (mirrors the PyTorch forward) for verification
# --------------------------------------------------------------------------- #
def resblock_ref(x_nhwc, w1, b1, w2, b2, ws, bs, stride):
    def conv(x, w, b, s, p):
        y = jax.lax.conv_general_dilated(
            x, w, window_strides=(s, s), padding=[(p, p), (p, p)],
            dimension_numbers=('NHWC', 'HWIO', 'NHWC'))
        return y + b.reshape(1, 1, 1, -1)

    h = jax.nn.relu(conv(x_nhwc, w1, b1, stride, 1))
    h = conv(h, w2, b2, 1, 1)
    if stride > 1:
        res = conv(x_nhwc, ws.reshape(1, 1, *ws.shape), bs, stride, 0)
    else:
        res = x_nhwc
    return jax.nn.relu(h + res)


if __name__ == "__main__":
    key = jax.random.PRNGKey(0)
    N, Cin, H, W = 2, 4, 16, 16
    Cout = 8
    stride = Cout // Cin   # ResBlock.downsample = out_channels // in_channels = 2

    ks = jax.random.split(key, 7)
    # PyTorch-convention input: NCHW
    x_nchw = jax.random.normal(ks[0], (N, Cin, H, W), jnp.float32)
    # Synthetic parameters (HWIO layout for the kernel / reference)
    w1 = jax.random.normal(ks[1], (3, 3, Cin, Cout), jnp.float32) * 0.1
    b1 = jax.random.normal(ks[2], (Cout,), jnp.float32) * 0.1
    w2 = jax.random.normal(ks[3], (3, 3, Cout, Cout), jnp.float32) * 0.1
    b2 = jax.random.normal(ks[4], (Cout,), jnp.float32) * 0.1
    ws = jax.random.normal(ks[5], (Cin, Cout), jnp.float32) * 0.1
    bs = jax.random.normal(ks[6], (Cout,), jnp.float32) * 0.1

    # layout: NCHW -> NHWC for the TPU kernel
    x_nhwc = jnp.transpose(x_nchw, (0, 2, 3, 1))

    packed, meta = pack_resblock_params(w1, b1, w2, b2, ws, bs, stride=stride)
    out_nhwc = resblock_forward(x_nhwc, packed, meta)
    out_nhwc = jax.block_until_ready(out_nhwc)
    out_nchw = jnp.transpose(out_nhwc, (0, 3, 1, 2))  # back to PyTorch layout

    ref = resblock_ref(x_nhwc, w1, b1, w2, b2, ws, bs, stride)
    # bf16 MXU inputs with f32 accumulation -> loose-ish tolerance
    np.testing.assert_allclose(np.asarray(out_nhwc), np.asarray(ref),
                               rtol=2e-2, atol=2e-2)
    assert out_nchw.shape == (N, Cout, H // stride, W // stride)
    print("KERNEL_OK")
</pallas_src>

<mosaic_0001>
module attributes {stable_mosaic.version = 11 : i64} {
  func.func @_resblock_kernel(%arg0: i32, %arg1: memref<1x10x10x128xbf16, #tpu.memory_space<vmem>>, %arg2: memref<512x128xbf16, #tpu.memory_space<vmem>>, %arg3: memref<1x128xf32, #tpu.memory_space<vmem>>, %arg4: memref<1280x128xbf16, #tpu.memory_space<vmem>>, %arg5: memref<1x128xf32, #tpu.memory_space<vmem>>, %arg6: memref<1x8x8x128xf32, #tpu.memory_space<vmem>>) attributes {dimension_semantics = [#tpu.dimension_semantics<parallel>], iteration_bounds = array<i64: 2>, scalar_prefetch = 0 : i64, scratch_operands = 0 : i64, tpu.core_type = #tpu.core_type<tc>, window_params = [{transform_indices = @transform_0, window_bounds = array<i64: 1, 10, 10, 128>}, {pipeline_mode = #tpu.pipeline_mode<synchronous>, transform_indices = @transform_1, window_bounds = array<i64: 512, 128>}, {pipeline_mode = #tpu.pipeline_mode<synchronous>, transform_indices = @transform_2, window_bounds = array<i64: 1, 128>}, {pipeline_mode = #tpu.pipeline_mode<synchronous>, transform_indices = @transform_3, window_bounds = array<i64: 1280, 128>}, {pipeline_mode = #tpu.pipeline_mode<synchronous>, transform_indices = @transform_4, window_bounds = array<i64: 1, 128>}, {transform_indices = @transform_5, window_bounds = array<i64: 1, 8, 8, 128>}]} {
    %c0 = arith.constant 0 : index
    %c1 = arith.constant 1 : index
    %c1_0 = arith.constant 1 : index
    %c0_1 = arith.constant 0 : index
    %0 = vector.load %arg1[%c0, %c1, %c1_0, %c0_1] : memref<1x10x10x128xbf16, #tpu.memory_space<vmem>>, vector<1x8x8x128xbf16>
    %c0_2 = arith.constant 0 : index
    %c0_3 = arith.constant 0 : index
    %c0_4 = arith.constant 0 : index
    %c0_5 = arith.constant 0 : index
    %1 = vector.load %arg1[%c0_2, %c0_3, %c0_4, %c0_5] : memref<1x10x10x128xbf16, #tpu.memory_space<vmem>>, vector<1x8x8x128xbf16>
    %c0_6 = arith.constant 0 : index
    %c0_7 = arith.constant 0 : index
    %c1_8 = arith.constant 1 : index
    %c0_9 = arith.constant 0 : index
    %2 = vector.load %arg1[%c0_6, %c0_7, %c1_8, %c0_9] : memref<1x10x10x128xbf16, #tpu.memory_space<vmem>>, vector<1x8x8x128xbf16>
    %c0_10 = arith.constant 0 : index
    %c1_11 = arith.constant 1 : index
    %c0_12 = arith.constant 0 : index
    %c0_13 = arith.constant 0 : index
    %3 = vector.load %arg1[%c0_10, %c1_11, %c0_12, %c0_13] : memref<1x10x10x128xbf16, #tpu.memory_space<vmem>>, vector<1x8x8x128xbf16>
    %4 = tpu.concatenate %1, %2, %3, %0 in 3 : vector<1x8x8x128xbf16>, vector<1x8x8x128xbf16>, vector<1x8x8x128xbf16>, vector<1x8x8x128xbf16> -> vector<1x8x8x512xbf16>
    %5 = vector.shape_cast %4 : vector<1x8x8x512xbf16> to vector<64x512xbf16>
    %c0_14 = arith.constant 0 : index
    %c0_15 = arith.constant 0 : index
    %6 = vector.load %arg2[%c0_14, %c0_15] : memref<512x128xbf16, #tpu.memory_space<vmem>>, vector<512x128xbf16>
    %cst = arith.constant dense<0.000000e+00> : vector<64x128xf32>
    %7 = tpu.matmul %5, %6, %cst {dimension_numbers = #tpu.dot_dimension_numbers<[1], [0], [0], [1], [0, 0, 1, 1], [], []>} : vector<64x512xbf16>, vector<512x128xbf16>, vector<64x128xf32> -> vector<64x128xf32>
    %c0_16 = arith.constant 0 : index
    %c0_17 = arith.constant 0 : index
    %8 = vector.load %arg3[%c0_16, %c0_17] : memref<1x128xf32, #tpu.memory_space<vmem>>, vector<1x128xf32>
    %9 = vector.broadcast %8 : vector<1x128xf32> to vector<64x128xf32>
    %10 = arith.addf %7, %9 : vector<64x128xf32>
    %cst_18 = arith.constant 0.000000e+00 : f32
    %11 = vector.broadcast %cst_18 : f32 to vector<64x128xf32>
    %12 = arith.maximumf %10, %11 : vector<64x128xf32>
    %13 = arith.truncf %12 : vector<64x128xf32> to vector<64x128xbf16>
    %14 = vector.shape_cast %13 : vector<64x128xbf16> to vector<1x8x8x128xbf16>
    %cst_19 = arith.constant 0.000000e+00 : bf16
    %15 = vector.broadcast %cst_19 : bf16 to vector<1x1x8x128xbf16>
    %cst_20 = arith.constant 0.000000e+00 : bf16
    %16 = vector.broadcast %cst_20 : bf16 to vector<1x10x1x128xbf16>
    %17 = tpu.concatenate %15, %14, %15 in 1 : vector<1x1x8x128xbf16>, vector<1x8x8x128xbf16>, vector<1x1x8x128xbf16> -> vector<1x10x8x128xbf16>
    %18 = tpu.concatenate %16, %17, %16 in 2 : vector<1x10x1x128xbf16>, vector<1x10x8x128xbf16>, vector<1x10x1x128xbf16> -> vector<1x10x10x128xbf16>
    %19 = vector.extract_strided_slice %18 {offsets = [0, 0, 0, 0], sizes = [1, 8, 8, 128], strides = [1, 1, 1, 1]} : vector<1x10x10x128xbf16> to vector<1x8x8x128xbf16>
    %20 = vector.extract_strided_slice %18 {offsets = [0, 0, 1, 0], sizes = [1, 8, 8, 128], strides = [1, 1, 1, 1]} : vector<1x10x10x128xbf16> to vector<1x8x8x128xbf16>
    %21 = vector.extract_strided_slice %18 {offsets = [0, 0, 2, 0], sizes = [1, 8, 8, 128], strides = [1, 1, 1, 1]} : vector<1x10x10x128xbf16> to vector<1x8x8x128xbf16>
    %22 = vector.extract_strided_slice %18 {offsets = [0, 1, 0, 0], sizes = [1, 8, 8, 128], strides = [1, 1, 1, 1]} : vector<1x10x10x128xbf16> to vector<1x8x8x128xbf16>
    %23 = vector.extract_strided_slice %18 {offsets = [0, 1, 1, 0], sizes = [1, 8, 8, 128], strides = [1, 1, 1, 1]} : vector<1x10x10x128xbf16> to vector<1x8x8x128xbf16>
    %24 = vector.extract_strided_slice %18 {offsets = [0, 1, 2, 0], sizes = [1, 8, 8, 128], strides = [1, 1, 1, 1]} : vector<1x10x10x128xbf16> to vector<1x8x8x128xbf16>
    %25 = vector.extract_strided_slice %18 {offsets = [0, 2, 0, 0], sizes = [1, 8, 8, 128], strides = [1, 1, 1, 1]} : vector<1x10x10x128xbf16> to vector<1x8x8x128xbf16>
    %26 = vector.extract_strided_slice %18 {offsets = [0, 2, 1, 0], sizes = [1, 8, 8, 128], strides = [1, 1, 1, 1]} : vector<1x10x10x128xbf16> to vector<1x8x8x128xbf16>
    %27 = vector.extract_strided_slice %18 {offsets = [0, 2, 2, 0], sizes = [1, 8, 8, 128], strides = [1, 1, 1, 1]} : vector<1x10x10x128xbf16> to vector<1x8x8x128xbf16>
    %28 = tpu.concatenate %19, %20, %21, %22, %23, %24, %25, %26, %27, %0 in 3 : vector<1x8x8x128xbf16>, vector<1x8x8x128xbf16>, vector<1x8x8x128xbf16>, vector<1x8x8x128xbf16>, vector<1x8x8x128xbf16>, vector<1x8x8x128xbf16>, vector<1x8x8x128xbf16>, vector<1x8x8x128xbf16>, vector<1x8x8x128xbf16>, vector<1x8x8x128xbf16> -> vector<1x8x8x1280xbf16>
    %29 = vector.shape_cast %28 : vector<1x8x8x1280xbf16> to vector<64x1280xbf16>
    %c0_21 = arith.constant 0 : index
    %c0_22 = arith.constant 0 : index
    %30 = vector.load %arg4[%c0_21, %c0_22] : memref<1280x128xbf16, #tpu.memory_space<vmem>>, vector<1280x128xbf16>
    %cst_23 = arith.constant dense<0.000000e+00> : vector<64x128xf32>
    %31 = tpu.matmul %29, %30, %cst_23 {dimension_numbers = #tpu.dot_dimension_numbers<[1], [0], [0], [1], [0, 0, 1, 1], [], []>} : vector<64x1280xbf16>, vector<1280x128xbf16>, vector<64x128xf32> -> vector<64x128xf32>
    %c0_24 = arith.constant 0 : index
    %c0_25 = arith.constant 0 : index
    %32 = vector.load %arg5[%c0_24, %c0_25] : memref<1x128xf32, #tpu.memory_space<vmem>>, vector<1x128xf32>
    %33 = vector.broadcast %32 : vector<1x128xf32> to vector<64x128xf32>
    %34 = arith.addf %31, %33 : vector<64x128xf32>
    %cst_26 = arith.constant 0.000000e+00 : f32
    %35 = vector.broadcast %cst_26 : f32 to vector<64x128xf32>
    %36 = arith.maximumf %34, %35 : vector<64x128xf32>
    %37 = vector.shape_cast %36 : vector<64x128xf32> to vector<1x8x8x128xf32>
    %c0_27 = arith.constant 0 : index
    %c0_28 = arith.constant 0 : index
    %c0_29 = arith.constant 0 : index
    %c0_30 = arith.constant 0 : index
    %38 = vector.load %arg6[%c0_27, %c0_28, %c0_29, %c0_30] : memref<1x8x8x128xf32, #tpu.memory_space<vmem>>, vector<1x8x8x128xf32>
    tpu.vector_store %arg6[%c0_27, %c0_28, %c0_29, %c0_30], %37 {strides = array<i32>} : memref<1x8x8x128xf32, #tpu.memory_space<vmem>>, vector<1x8x8x128xf32>,
    return
  }
  func.func @transform_0(%arg0: i32) -> (i32, i32, i32, i32) {
    %c0_i32 = arith.constant 0 : i32
    %c0_i32_0 = arith.constant 0 : i32
    %c0_i32_1 = arith.constant 0 : i32
    %c0_i32_2 = arith.constant 0 : i32
    return %arg0, %c0_i32, %c0_i32_0, %c0_i32_1 : i32, i32, i32, i32
  }
  func.func @transform_1(%arg0: i32) -> (i32, i32) {
    %c0_i32 = arith.constant 0 : i32
    %c0_i32_0 = arith.constant 0 : i32
    %c0_i32_1 = arith.constant 0 : i32
    return %c0_i32, %c0_i32_0 : i32, i32
  }
  func.func @transform_2(%arg0: i32) -> (i32, i32) {
    %c0_i32 = arith.constant 0 : i32
    %c0_i32_0 = arith.constant 0 : i32
    %c0_i32_1 = arith.constant 0 : i32
    return %c0_i32, %c0_i32_0 : i32, i32
  }
  func.func @transform_3(%arg0: i32) -> (i32, i32) {
    %c0_i32 = arith.constant 0 : i32
    %c0_i32_0 = arith.constant 0 : i32
    %c0_i32_1 = arith.constant 0 : i32
    return %c0_i32, %c0_i32_0 : i32, i32
  }
  func.func @transform_4(%arg0: i32) -> (i32, i32) {
    %c0_i32 = arith.constant 0 : i32
    %c0_i32_0 = arith.constant 0 : i32
    %c0_i32_1 = arith.constant 0 : i32
    return %c0_i32, %c0_i32_0 : i32, i32
  }
  func.func @transform_5(%arg0: i32) -> (i32, i32, i32, i32) {
    %c0_i32 = arith.constant 0 : i32
    %c0_i32_0 = arith.constant 0 : i32
    %c0_i32_1 = arith.constant 0 : i32
    %c0_i32_2 = arith.constant 0 : i32
    return %arg0, %c0_i32, %c0_i32_0, %c0_i32_1 : i32, i32, i32, i32
  }
}

</mosaic_0001>

<llo_original>
// kernel: _resblock_apply.1
$region0: #{_resblock_apply.1}
  #allocation0 [shape = 'u32[]', space=smem, size = 0x4, offset = 0x4, fixed_abs, tag = 'smem constant byte address 0x4 - core index']
  #allocation1 [shape = 'u32[144,128]{1,0:T(1,128)}', space=vmem, size = 0x12000, scoped, tag = 'internal scratch']
  %s0 = inlined_call_operand.vmem [shape: bf16[2,10,10,128], index: 0, kind: input, shape index: {}]
  %s1 = inlined_call_operand.vmem [shape: bf16[512,128], index: 1, kind: input, shape index: {}]
  %s2 = inlined_call_operand.vmem [shape: f32[1,128], index: 2, kind: input, shape index: {}]
  %s3 = inlined_call_operand.vmem [shape: bf16[1280,128], index: 3, kind: input, shape index: {}]
  %s4 = inlined_call_operand.vmem [shape: f32[1,128], index: 4, kind: input, shape index: {}]
  %s5 = inlined_call_operand.hbm [shape: f32[2,8,8,128], index: 5, kind: output, shape index: {}]
  %s6 = sld [smem:[#allocation0]]
  $region53: #{_resblock_apply.1} parent=0
    _
  %s8 = ssub.s32 1, %s6
  %s9 = scalar_select 0, %s8, %s6
  $region1: #{_resblock_apply.1} parent=0
    #allocation2 [shape = 'u8[65536]{0}', space=vmem, size = 0x10000, scoped, tag = 'output window, operand 0']
    #allocation3 [shape = 's32[2]{0}', space=sflag, size = 0x8, scoped, tag = 'scoped memory for _resblock_apply.1']
    %10 = vsyncpa [#allocation3], 0
    %s11 = scalar_lea.sflag [#allocation3], 1
    %12 = vsyncpa %s11, 0
    loop: start=0, step=1, limit=4
    $region2: #{_resblock_apply.1} parent=1 // loop_pre_header
      _
    $region3: #{_resblock_apply.1} parent=1 // loop_header
      %s14 = sphi 0, %s18
      %p15 = scmp.ge.s32.totalorder %s14, 4
      %s24 = sphi 0, %s26
      %s27 = sphi 0, %s24
      %s28 = sphi 0, %s27
      %s44 = sphi 0, %s28
      %s48 = sphi 0, %s48
      %s50 = sphi 0, %s48
      %s51 = sphi 0, %s50
      %s65 = sphi 0, %s51
      %s69 = sphi 0, %s69
      %s71 = sphi 0, %s69
      %s72 = sphi 0, %s71
      %s86 = sphi 0, %s72
      %s90 = sphi 0, %s90
      %s92 = sphi 0, %s90
      %s93 = sphi 0, %s92
      %s107 = sphi 0, %s93
      %s111 = sphi 0, %s111
      %s113 = sphi 0, %s111
      %s114 = sphi 0, %s113
      %s128 = sphi 0, %s114
      %s134 = sphi 0, %s136
      %s137 = sphi 0, %s134
      %s138 = sphi 0, %s137
      %s154 = sphi 0, %s138
    $region4: #{_resblock_apply.1} parent=1 // loop_header_branch
      %17 = sbr.rel (%p15) target = $region8
    $region5: #{_resblock_apply.1} parent=1 // loop_body
      %s19 = ssub.s32 %s14, 1
      %s20 = ssub.s32 %s14, 2
      %s21 = sadd.s32 %s14, 1
      %s22 = ssub.s32 %s14, %s21
      %p23 = scmp.eq.s32.totalorder %s22, 0
      %s25 = sadd.s32 %s24, 1
      %s26 = scalar_select %p23, %s24, %s25
      %p29 = pneg %p23
      %p30 = scmp.eq.s32.totalorder %s14, 1
      %p31 = por %p29, %p30
      %p32 = scmp.ne.s32.totalorder %s24, %s27
      %p33 = scmp.eq.s32.totalorder %s14, 0
      %p34 = por %p32, %p33
      %p35 = scmp.ne.s32.totalorder %s24, %s27
      %p36 = scmp.eq.s32.totalorder %s19, 1
      %p37 = por %p35, %p36
      %p38 = scmp.ne.s32.totalorder %s27, %s28
      %p39 = scmp.eq.s32.totalorder %s19, 0
      %p40 = por %p38, %p39
      %p41 = scmp.ne.s32.totalorder %s27, %s28
      %p42 = scmp.eq.s32.totalorder %s20, 1
      %p43 = por %p41, %p42
      %p45 = scmp.ne.s32.totalorder %s28, %s44
      %p46 = scmp.eq.s32.totalorder %s20, 0
      %p47 = por %p45, %p46
      %s49 = sadd.s32 %s48, 1
      %p52 = scmp.eq.s32.totalorder %s14, 1
      %p53 = scmp.ne.s32.totalorder %s48, %s50
      %p54 = scmp.eq.s32.totalorder %s14, 0
      %p55 = por %p53, %p54
      %p56 = scmp.ne.s32.totalorder %s48, %s50
      %p57 = scmp.eq.s32.totalorder %s19, 1
      %p58 = por %p56, %p57
      %p59 = scmp.ne.s32.totalorder %s50, %s51
      %p60 = scmp.eq.s32.totalorder %s19, 0
      %p61 = por %p59, %p60
      %p62 = scmp.ne.s32.totalorder %s50, %s51
      %p63 = scmp.eq.s32.totalorder %s20, 1
      %p64 = por %p62, %p63
      %p66 = scmp.ne.s32.totalorder %s51, %s65
      %p67 = scmp.eq.s32.totalorder %s20, 0
      %p68 = por %p66, %p67
      %s70 = sadd.s32 %s69, 1
      %p73 = scmp.eq.s32.totalorder %s14, 1
      %p74 = scmp.ne.s32.totalorder %s69, %s71
      %p75 = scmp.eq.s32.totalorder %s14, 0
      %p76 = por %p74, %p75
      %p77 = scmp.ne.s32.totalorder %s69, %s71
      %p78 = scmp.eq.s32.totalorder %s19, 1
      %p79 = por %p77, %p78
      %p80 = scmp.ne.s32.totalorder %s71, %s72
      %p81 = scmp.eq.s32.totalorder %s19, 0
      %p82 = por %p80, %p81
      %p83 = scmp.ne.s32.totalorder %s71, %s72
      %p84 = scmp.eq.s32.totalorder %s20, 1
      %p85 = por %p83, %p84
      %p87 = scmp.ne.s32.totalorder %s72, %s86
      %p88 = scmp.eq.s32.totalorder %s20, 0
      %p89 = por %p87, %p88
      %s91 = sadd.s32 %s90, 1
      %p94 = scmp.eq.s32.totalorder %s14, 1
      %p95 = scmp.ne.s32.totalorder %s90, %s92
      %p96 = scmp.eq.s32.totalorder %s14, 0
      %p97 = por %p95, %p96
      %p98 = scmp.ne.s32.totalorder %s90, %s92
      %p99 = scmp.eq.s32.totalorder %s19, 1
      %p100 = por %p98, %p99
      %p101 = scmp.ne.s32.totalorder %s92, %s93
      %p102 = scmp.eq.s32.totalorder %s19, 0
      %p103 = por %p101, %p102
      %p104 = scmp.ne.s32.totalorder %s92, %s93
      %p105 = scmp.eq.s32.totalorder %s20, 1
      %p106 = por %p104, %p105
      %p108 = scmp.ne.s32.totalorder %s93, %s107
      %p109 = scmp.eq.s32.totalorder %s20, 0
      %p110 = por %p108, %p109
      %s112 = sadd.s32 %s111, 1
      %p115 = scmp.eq.s32.totalorder %s14, 1
      %p116 = scmp.ne.s32.totalorder %s111, %s113
      %p117 = scmp.eq.s32.totalorder %s14, 0
      %p118 = por %p116, %p117
      %p119 = scmp.ne.s32.totalorder %s111, %s113
      %p120 = scmp.eq.s32.totalorder %s19, 1
      %p121 = por %p119, %p120
      %p122 = scmp.ne.s32.totalorder %s113, %s114
      %p123 = scmp.eq.s32.totalorder %s19, 0
      %p124 = por %p122, %p123
      %p125 = scmp.ne.s32.totalorder %s113, %s114
      %p126 = scmp.eq.s32.totalorder %s20, 1
      %p127 = por %p125, %p126
      %p129 = scmp.ne.s32.totalorder %s114, %s128
      %p130 = scmp.eq.s32.totalorder %s20, 0
      %p131 = por %p129, %p130
      %s132 = ssub.s32 %s14, %s21
      %p133 = scmp.eq.s32.totalorder %s132, 0
      %s135 = sadd.s32 %s134, 1
      %s136 = scalar_select %p133, %s134, %s135
      %p139 = pneg %p133
      %p140 = scmp.eq.s32.totalorder %s14, 1
      %p141 = por %p139, %p140
      %p142 = scmp.ne.s32.totalorder %s134, %s137
      %p143 = scmp.eq.s32.totalorder %s14, 0
      %p144 = por %p142, %p143
      %p145 = scmp.ne.s32.totalorder %s134, %s137
      %p146 = scmp.eq.s32.totalorder %s19, 1
      %p147 = por %p145, %p146
      %p148 = scmp.ne.s32.totalorder %s137, %s138
      %p149 = scmp.eq.s32.totalorder %s19, 0
      %p150 = por %p148, %p149
      %p151 = scmp.ne.s32.totalorder %s137, %s138
      %p152 = scmp.eq.s32.totalorder %s20, 1
      %p153 = por %p151, %p152
      %p155 = scmp.ne.s32.totalorder %s138, %s154
      %p156 = scmp.eq.s32.totalorder %s20, 0
      %p157 = por %p155, %p156
      %p158 = scmp.le.s32.totalorder 1, %s14
      %p159 = scmp.lt.s32.totalorder %s14, 3
      %p160 = pnand %p158, %p159
      %p161 = pneg %p160
      // Predicated region
      $region9: #{_resblock_apply.1} parent=5 // pred_check
        _
      $region10: #{_resblock_apply.1} parent=5 // pred_check_branch
        %163 = sbr.rel (%p160) target = $region12
      $region11: #{_resblock_apply.1} parent=5 // pred_region
        %s164 = ssub.s32 %s14, 1
        // Predicated region
        $region13: #{_resblock_apply.1} parent=11 // pred_check
          %p165 = pneg %p61
        $region14: #{_resblock_apply.1} parent=11 // pred_check_branch
          %167 = sbr.rel (%p165) target = $region16
        $region15: #{_resblock_apply.1} parent=11 // pred_region
          _
        $region16: #{_resblock_apply.1} parent=11 // pred_fallthru
          _
        // Predicated region
        $region17: #{_resblock_apply.1} parent=11 // pred_check
          %p168 = pneg %p82
        $region18: #{_resblock_apply.1} parent=11 // pred_check_branch
          %170 = sbr.rel (%p168) target = $region20
        $region19: #{_resblock_apply.1} parent=11 // pred_region
          _
        $region20: #{_resblock_apply.1} parent=11 // pred_fallthru
          _
        // Predicated region
        $region21: #{_resblock_apply.1} parent=11 // pred_check
          %p171 = pneg %p103
        $region22: #{_resblock_apply.1} parent=11 // pred_check_branch
          %173 = sbr.rel (%p171) target = $region24
        $region23: #{_resblock_apply.1} parent=11 // pred_region
          _
        $region24: #{_resblock_apply.1} parent=11 // pred_fallthru
          _
        // Predicated region
        $region25: #{_resblock_apply.1} parent=11 // pred_check
          %p174 = pneg %p124
        $region26: #{_resblock_apply.1} parent=11 // pred_check_branch
          %176 = sbr.rel (%p174) target = $region28
        $region27: #{_resblock_apply.1} parent=11 // pred_region
          _
        $region28: #{_resblock_apply.1} parent=11 // pred_fallthru
          _
      $region12: #{_resblock_apply.1} parent=5 // pred_fallthru
        _
      %p177 = scmp.lt.s32.totalorder %s14, 2
      // Predicated region
      $region29: #{_resblock_apply.1} parent=5 // pred_check
        %p178 = pneg %p177
      $region30: #{_resblock_apply.1} parent=5 // pred_check_branch
        %180 = sbr.rel (%p178) target = $region32
      $region31: #{_resblock_apply.1} parent=5 // pred_region
        // Predicated region
        $region33: #{_resblock_apply.1} parent=31 // pred_check
          %p181 = pneg %p34
        $region34: #{_resblock_apply.1} parent=31 // pred_check_branch
          %183 = sbr.rel (%p181) target = $region36
        $region35: #{_resblock_apply.1} parent=31 // pred_region
          %p184 = scmp.lt.s32.totalorder %s14, 1
          %s185 = scalar_select %p184, %s14, 1
          %s186 = smul.addr %s185, 20
          %s187 = smul.addr %s186, 4
          %s188 = scalar_lea.vmem %s0, %s187
        $region36: #{_resblock_apply.1} parent=31 // pred_fallthru
          _
      $region32: #{_resblock_apply.1} parent=5 // pred_fallthru
        _
      %p189 = scmp.le.s32.totalorder 1, %s14
      %p190 = scmp.lt.s32.totalorder %s14, 3
      %p191 = pnand %p189, %p190
      %p192 = pneg %p191
      // Predicated region
      $region37: #{_resblock_apply.1} parent=5 // pred_check
        _
      $region38: #{_resblock_apply.1} parent=5 // pred_check_branch
        %194 = sbr.rel (%p191) target = $region40
      $region39: #{_resblock_apply.1} parent=5 // pred_region
        %s195 = ssub.s32 %s14, 1
        %p196 = scmp.lt.s32.totalorder %s19, 1
        %s197 = scalar_select %p196, %s19, 1
        %s198 = smul.addr %s197, 20
        %s199 = smul.addr %s198, 4
        %s200 = scalar_lea.vmem %s0, %s199
        %p201 = pneg %p40
        %p202 = pneg %p37
        %p203 = pneg %p61
        %p204 = pneg %p58
        %p205 = pneg %p82
        %p206 = pneg %p79
        %p207 = pneg %p103
        %p208 = pneg %p100
        %p209 = pneg %p124
        %p210 = pneg %p121
        %p211 = pneg %p150
        %p212 = pneg %p147
        %s213 = sand.u32 %s137, 1
        %s214 = scalar_lea.sflag [#allocation3], %s213
        %s215 = sand.u32 %s137, 1
        %s216 = smul.addr %s215, 64
        %s217 = scalar_lea.vmem [#allocation2], %s216
        %p218 = scmp.lt.s32.totalorder %s19, 1
        %s219 = scalar_select %p218, %s19, 1
        %s220 = smul.addr %s219, 20
        %s221 = smul.addr %s220, 4
        %s222 = scalar_lea.vmem %s0, %s221
        %s224 = scalar_lea.vmem %s222, 8
        %v225 = vld [vmem:[%s224] sm:$0xf]
        %v226 = vld [vmem:[%s224 + $0x4] sm:$0x1]
        %v227 = vld [vmem:[%s224 + $0x8] sm:$0xf]
        %v228 = vld [vmem:[%s224 + $0xc] sm:$0x1]
        %v229 = vld [vmem:[%s224 + $0x10] sm:$0xf]
        %v230 = vld [vmem:[%s224 + $0x14] sm:$0x1]
        %v231 = vld [vmem:[%s224 + $0x18] sm:$0xf]
        %v232 = vld [vmem:[%s224 + $0x1c] sm:$0x1]
        %v233 = vld [vmem:[%s224 + $0x20] sm:$0xf]
        %v234 = vld [vmem:[%s224 + $0x24] sm:$0x1]
        %v235 = vld [vmem:[%s224 + $0x28] sm:$0xf]
        %v236 = vld [vmem:[%s224 + $0x2c] sm:$0x1]
        %v237 = vld [vmem:[%s224 + $0x30] sm:$0xf]
        %v238 = vld [vmem:[%s224 + $0x34] sm:$0x1]
        %v239 = vld [vmem:[%s224 + $0x38] sm:$0xf]
        %v240 = vld [vmem:[%s224 + $0x3c] sm:$0x1]
        %v241 = vld [vmem:[%s222] sm:$0xf]
        %v242 = vld [vmem:[%s222 + $0x8] sm:$0xf]
        %v243 = vld [vmem:[%s222 + $0x10] sm:$0xf]
        %v244 = vld [vmem:[%s222 + $0x18] sm:$0xf]
        %v245 = vld [vmem:[%s222 + $0x20] sm:$0xf]
        %v246 = vld [vmem:[%s222 + $0x28] sm:$0xf]
        %v247 = vld [vmem:[%s222 + $0x30] sm:$0xf]
        %v248 = vld [vmem:[%s222 + $0x38] sm:$0xf]
        %v249 = vld [vmem:[%s222 + $0x4] sm:$0x1]
        %v250 = vld [vmem:[%s222 + $0xc] sm:$0x1]
        %v251 = vld [vmem:[%s222 + $0x14] sm:$0x1]
        %v252 = vld [vmem:[%s222 + $0x1c] sm:$0x1]
        %v253 = vld [vmem:[%s222 + $0x24] sm:$0x1]
        %v254 = vld [vmem:[%s222 + $0x2c] sm:$0x1]
        %v255 = vld [vmem:[%s222 + $0x34] sm:$0x1]
        %v256 = vld [vmem:[%s222 + $0x3c] sm:$0x1]
        %v273 = vunpack.c.l.b16 %v241
        %v274 = vunpack.c.l.b16 %v249
        %v275 = vunpack.c.l.b16 %v242
        %v276 = vunpack.c.l.b16 %v250
        %v277 = vunpack.c.l.b16 %v243
        %v278 = vunpack.c.l.b16 %v251
        %v279 = vunpack.c.l.b16 %v244
        %v280 = vunpack.c.l.b16 %v252
        %v281 = vunpack.c.l.b16 %v245
        %v282 = vunpack.c.l.b16 %v253
        %v283 = vunpack.c.l.b16 %v246
        %v284 = vunpack.c.l.b16 %v254
        %v285 = vunpack.c.l.b16 %v247
        %v286 = vunpack.c.l.b16 %v255
        %v287 = vunpack.c.l.b16 %v248
        %v288 = vunpack.c.l.b16 %v256
        %v289 = vpack.c.b16 %v274, %v273
        %v290 = vpack.c.b16 %v276, %v275
        %v291 = vpack.c.b16 %v278, %v277
        %v292 = vpack.c.b16 %v280, %v279
        %v293 = vpack.c.b16 %v282, %v281
        %v294 = vpack.c.b16 %v284, %v283
        %v295 = vpack.c.b16 %v286, %v285
        %v296 = vpack.c.b16 %v288, %v287
        %v298 = vshrl.u32 %v289, 16
        %v300 = vshll.u32 %v289, 16
        %v302 = vrot.slane %v300, 1
        %v303 = vor.u32 %v298, %v302
        %v305 = vshrl.u32 %v290, 16
        %v307 = vshll.u32 %v290, 16
        %v309 = vrot.slane %v307, 1
        %v310 = vor.u32 %v305, %v309
        %v312 = vshrl.u32 %v291, 16
        %v314 = vshll.u32 %v291, 16
        %v316 = vrot.slane %v314, 1
        %v317 = vor.u32 %v312, %v316
        %v319 = vshrl.u32 %v292, 16
        %v321 = vshll.u32 %v292, 16
        %v323 = vrot.slane %v321, 1
        %v324 = vor.u32 %v319, %v323
        %v326 = vshrl.u32 %v293, 16
        %v328 = vshll.u32 %v293, 16
        %v330 = vrot.slane %v328, 1
        %v331 = vor.u32 %v326, %v330
        %v333 = vshrl.u32 %v294, 16
        %v335 = vshll.u32 %v294, 16
        %v337 = vrot.slane %v335, 1
        %v338 = vor.u32 %v333, %v337
        %v340 = vshrl.u32 %v295, 16
        %v342 = vshll.u32 %v295, 16
        %v344 = vrot.slane %v342, 1
        %v345 = vor.u32 %v340, %v344
        %v347 = vshrl.u32 %v296, 16
        %v349 = vshll.u32 %v296, 16
        %v351 = vrot.slane %v349, 1
        %v352 = vor.u32 %v347, %v351
        %v369 = vunpack.c.l.b16 %v225
        %v370 = vunpack.c.l.b16 %v226
        %v371 = vunpack.c.l.b16 %v227
        %v372 = vunpack.c.l.b16 %v228
        %v373 = vunpack.c.l.b16 %v229
        %v374 = vunpack.c.l.b16 %v230
        %v375 = vunpack.c.l.b16 %v231
        %v376 = vunpack.c.l.b16 %v232
        %v377 = vunpack.c.l.b16 %v233
        %v378 = vunpack.c.l.b16 %v234
        %v379 = vunpack.c.l.b16 %v235
        %v380 = vunpack.c.l.b16 %v236
        %v381 = vunpack.c.l.b16 %v237
        %v382 = vunpack.c.l.b16 %v238
        %v383 = vunpack.c.l.b16 %v239
        %v384 = vunpack.c.l.b16 %v240
        %v385 = vpack.c.b16 %v370, %v369
        %v386 = vpack.c.b16 %v372, %v371
        %v387 = vpack.c.b16 %v374, %v373
        %v388 = vpack.c.b16 %v376, %v375
        %v389 = vpack.c.b16 %v378, %v377
        %v390 = vpack.c.b16 %v380, %v379
        %v391 = vpack.c.b16 %v382, %v381
        %v392 = vpack.c.b16 %v384, %v383
        %v394 = vshrl.u32 %v385, 16
        %v396 = vshll.u32 %v385, 16
        %v398 = vrot.slane %v396, 1
        %v399 = vor.u32 %v394, %v398
        %v401 = vshrl.u32 %v386, 16
        %v403 = vshll.u32 %v386, 16
        %v405 = vrot.slane %v403, 1
        %v406 = vor.u32 %v401, %v405
        %v408 = vshrl.u32 %v387, 16
        %v410 = vshll.u32 %v387, 16
        %v412 = vrot.slane %v410, 1
        %v413 = vor.u32 %v408, %v412
        %v415 = vshrl.u32 %v388, 16
        %v417 = vshll.u32 %v388, 16
        %v419 = vrot.slane %v417, 1
        %v420 = vor.u32 %v415, %v419
        %v422 = vshrl.u32 %v389, 16
        %v424 = vshll.u32 %v389, 16
        %v426 = vrot.slane %v424, 1
        %v427 = vor.u32 %v422, %v426
        %v429 = vshrl.u32 %v390, 16
        %v431 = vshll.u32 %v390, 16
        %v433 = vrot.slane %v431, 1
        %v434 = vor.u32 %v429, %v433
        %v436 = vshrl.u32 %v391, 16
        %v438 = vshll.u32 %v391, 16
        %v440 = vrot.slane %v438, 1
        %v441 = vor.u32 %v436, %v440
        %v443 = vshrl.u32 %v392, 16
        %v445 = vshll.u32 %v392, 16
        %v447 = vrot.slane %v445, 1
        %v448 = vor.u32 %v443, %v447
        %v449 = vunpack.c.l.b16 %v303
        %v450 = vunpack.c.l.b16 %v399
        %v451 = vunpack.c.l.b16 %v310
        %v452 = vunpack.c.l.b16 %v406
        %v453 = vunpack.c.l.b16 %v317
        %v454 = vunpack.c.l.b16 %v413
        %v455 = vunpack.c.l.b16 %v324
        %v456 = vunpack.c.l.b16 %v420
        %v457 = vunpack.c.l.b16 %v331
        %v458 = vunpack.c.l.b16 %v427
        %v459 = vunpack.c.l.b16 %v338
        %v460 = vunpack.c.l.b16 %v434
        %v461 = vunpack.c.l.b16 %v345
        %v462 = vunpack.c.l.b16 %v441
        %v463 = vunpack.c.l.b16 %v352
        %v464 = vunpack.c.l.b16 %v448
        %v465 = vld [vmem:[%s1] sm:$0xf]
        %v466 = vld [vmem:[%s1 + $0x4] sm:$0xf]
        %v467 = vld [vmem:[%s1 + $0x8] sm:$0xf]
        %v468 = vld [vmem:[%s1 + $0xc] sm:$0xf]
        %v469 = vld [vmem:[%s1 + $0x10] sm:$0xf]
        %v470 = vld [vmem:[%s1 + $0x14] sm:$0xf]
        %v471 = vld [vmem:[%s1 + $0x18] sm:$0xf]
        %v472 = vld [vmem:[%s1 + $0x1c] sm:$0xf]
        %v473 = vld [vmem:[%s1 + $0x20] sm:$0xf]
        %v474 = vld [vmem:[%s1 + $0x24] sm:$0xf]
        %v475 = vld [vmem:[%s1 + $0x28] sm:$0xf]
        %v476 = vld [vmem:[%s1 + $0x2c] sm:$0xf]
        %v477 = vld [vmem:[%s1 + $0x30] sm:$0xf]
        %v478 = vld [vmem:[%s1 + $0x34] sm:$0xf]
        %v479 = vld [vmem:[%s1 + $0x38] sm:$0xf]
        %v480 = vld [vmem:[%s1 + $0x3c] sm:$0xf]
        %v481 = vld [vmem:[%s1 + $0x40] sm:$0xf]
        %v482 = vld [vmem:[%s1 + $0x44] sm:$0xf]
        %v483 = vld [vmem:[%s1 + $0x48] sm:$0xf]
        %v484 = vld [vmem:[%s1 + $0x4c] sm:$0xf]
        %v485 = vld [vmem:[%s1 + $0x50] sm:$0xf]
        %v486 = vld [vmem:[%s1 + $0x54] sm:$0xf]
        %v487 = vld [vmem:[%s1 + $0x58] sm:$0xf]
        %v488 = vld [vmem:[%s1 + $0x5c] sm:$0xf]
        %v489 = vld [vmem:[%s1 + $0x60] sm:$0xf]
        %v490 = vld [vmem:[%s1 + $0x64] sm:$0xf]
        %v491 = vld [vmem:[%s1 + $0x68] sm:$0xf]
        %v492 = vld [vmem:[%s1 + $0x6c] sm:$0xf]
        %v493 = vld [vmem:[%s1 + $0x70] sm:$0xf]
        %v494 = vld [vmem:[%s1 + $0x74] sm:$0xf]
        %v495 = vld [vmem:[%s1 + $0x78] sm:$0xf]
        %v496 = vld [vmem:[%s1 + $0x7c] sm:$0xf]
        %v497 = vld [vmem:[%s1 + $0x80] sm:$0xf]
        %v498 = vld [vmem:[%s1 + $0x84] sm:$0xf]
        %v499 = vld [vmem:[%s1 + $0x88] sm:$0xf]
        %v500 = vld [vmem:[%s1 + $0x8c] sm:$0xf]
        %v501 = vld [vmem:[%s1 + $0x90] sm:$0xf]
        %v502 = vld [vmem:[%s1 + $0x94] sm:$0xf]
        %v503 = vld [vmem:[%s1 + $0x98] sm:$0xf]
        %v504 = vld [vmem:[%s1 + $0x9c] sm:$0xf]
        %v505 = vld [vmem:[%s1 + $0xa0] sm:$0xf]
        %v506 = vld [vmem:[%s1 + $0xa4] sm:$0xf]
        %v507 = vld [vmem:[%s1 + $0xa8] sm:$0xf]
        %v508 = vld [vmem:[%s1 + $0xac] sm:$0xf]
        %v509 = vld [vmem:[%s1 + $0xb0] sm:$0xf]
        %v510 = vld [vmem:[%s1 + $0xb4] sm:$0xf]
        %v511 = vld [vmem:[%s1 + $0xb8] sm:$0xf]
        %v512 = vld [vmem:[%s1 + $0xbc] sm:$0xf]
        %v513 = vld [vmem:[%s1 + $0xc0] sm:$0xf]
        %v514 = vld [vmem:[%s1 + $0xc4] sm:$0xf]
        %v515 = vld [vmem:[%s1 + $0xc8] sm:$0xf]
        %v516 = vld [vmem:[%s1 + $0xcc] sm:$0xf]
        %v517 = vld [vmem:[%s1 + $0xd0] sm:$0xf]
        %v518 = vld [vmem:[%s1 + $0xd4] sm:$0xf]
        %v519 = vld [vmem:[%s1 + $0xd8] sm:$0xf]
        %v520 = vld [vmem:[%s1 + $0xdc] sm:$0xf]
        %v521 = vld [vmem:[%s1 + $0xe0] sm:$0xf]
        %v522 = vld [vmem:[%s1 + $0xe4] sm:$0xf]
        %v523 = vld [vmem:[%s1 + $0xe8] sm:$0xf]
        %v524 = vld [vmem:[%s1 + $0xec] sm:$0xf]
        %v525 = vld [vmem:[%s1 + $0xf0] sm:$0xf]
        %v526 = vld [vmem:[%s1 + $0xf4] sm:$0xf]
        %v527 = vld [vmem:[%s1 + $0xf8] sm:$0xf]
        %v528 = vld [vmem:[%s1 + $0xfc] sm:$0xf]
        %v529 = vld [vmem:[%s2] sm:$0x1]
        %v531 = vlaneseq
        %v532 = vshrl.u32 %v531, 7
        %v533 = vsub.s32 0, %v532
        %v534 = vrot.slane %v529, %v533
        %v536 = vpack.c.b16 %v275, %v273
        %v537 = vpack.c.b16 %v451, %v449
        %v538 = vpack.c.b16 %v371, %v369
        %v539 = vpack.c.b16 %v452, %v450
        %v540 = vpack.c.b16 %v279, %v277
        %v541 = vpack.c.b16 %v455, %v453
        %v542 = vpack.c.b16 %v375, %v373
        %v543 = vpack.c.b16 %v456, %v454
        %v544 = vpack.c.b16 %v283, %v281
        %v545 = vpack.c.b16 %v459, %v457
        %v546 = vpack.c.b16 %v379, %v377
        %v547 = vpack.c.b16 %v460, %v458
        %v548 = vpack.c.b16 %v287, %v285
        %v549 = vpack.c.b16 %v463, %v461
        %v550 = vpack.c.b16 %v383, %v381
        %v551 = vpack.c.b16 %v464, %v462
        %v632 = vunpack.c.l.b16 %v465
        %v633 = vunpack.c.l.b16 %v466
        %v634 = vunpack.c.l.b16 %v467
        %v635 = vunpack.c.l.b16 %v468
        %v636 = vunpack.c.l.b16 %v469
        %v637 = vunpack.c.l.b16 %v470
        %v638 = vunpack.c.l.b16 %v471
        %v639 = vunpack.c.l.b16 %v472
        %v640 = vunpack.c.l.b16 %v473
        %v641 = vunpack.c.l.b16 %v474
        %v642 = vunpack.c.l.b16 %v475
        %v643 = vunpack.c.l.b16 %v476
        %v644 = vunpack.c.l.b16 %v477
        %v645 = vunpack.c.l.b16 %v478
        %v646 = vunpack.c.l.b16 %v479
        %v647 = vunpack.c.l.b16 %v480
        %v648 = vunpack.c.l.b16 %v481
        %v649 = vunpack.c.l.b16 %v482
        %v650 = vunpack.c.l.b16 %v483
        %v651 = vunpack.c.l.b16 %v484
        %v652 = vunpack.c.l.b16 %v485
        %v653 = vunpack.c.l.b16 %v486
        %v654 = vunpack.c.l.b16 %v487
        %v655 = vunpack.c.l.b16 %v488
        %v656 = vunpack.c.l.b16 %v489
        %v657 = vunpack.c.l.b16 %v490
        %v658 = vunpack.c.l.b16 %v491
        %v659 = vunpack.c.l.b16 %v492
        %v660 = vunpack.c.l.b16 %v493
        %v661 = vunpack.c.l.b16 %v494
        %v662 = vunpack.c.l.b16 %v495
        %v663 = vunpack.c.l.b16 %v496
        %v664 = vunpack.c.l.b16 %v497
        %v665 = vunpack.c.l.b16 %v498
        %v666 = vunpack.c.l.b16 %v499
        %v667 = vunpack.c.l.b16 %v500
        %v668 = vunpack.c.l.b16 %v501
        %v669 = vunpack.c.l.b16 %v502
        %v670 = vunpack.c.l.b16 %v503
        %v671 = vunpack.c.l.b16 %v504
        %v672 = vunpack.c.l.b16 %v505
        %v673 = vunpack.c.l.b16 %v506
        %v674 = vunpack.c.l.b16 %v507
        %v675 = vunpack.c.l.b16 %v508
        %v676 = vunpack.c.l.b16 %v509
        %v677 = vunpack.c.l.b16 %v510
        %v678 = vunpack.c.l.b16 %v511
        %v679 = vunpack.c.l.b16 %v512
        %v680 = vunpack.c.l.b16 %v513
        %v681 = vunpack.c.l.b16 %v514
        %v682 = vunpack.c.l.b16 %v515
        %v683 = vunpack.c.l.b16 %v516
        %v684 = vunpack.c.l.b16 %v517
        %v685 = vunpack.c.l.b16 %v518
        %v686 = vunpack.c.l.b16 %v519
        %v687 = vunpack.c.l.b16 %v520
        %v688 = vunpack.c.l.b16 %v521
        %v689 = vunpack.c.l.b16 %v522
        %v690 = vunpack.c.l.b16 %v523
        %v691 = vunpack.c.l.b16 %v524
        %v692 = vunpack.c.l.b16 %v525
        %v693 = vunpack.c.l.b16 %v526
        %v694 = vunpack.c.l.b16 %v527
        %v695 = vunpack.c.l.b16 %v528
        %v696 = vpack.c.b16 %v633, %v632
        %v697 = vpack.c.b16 %v635, %v634
        %v698 = vpack.c.b16 %v637, %v636
        %v699 = vpack.c.b16 %v639, %v638
        %v700 = vpack.c.b16 %v641, %v640
        %v701 = vpack.c.b16 %v643, %v642
        %v702 = vpack.c.b16 %v645, %v644
        %v703 = vpack.c.b16 %v647, %v646
        %v704 = vpack.c.b16 %v649, %v648
        %v705 = vpack.c.b16 %v651, %v650
        %v706 = vpack.c.b16 %v653, %v652
        %v707 = vpack.c.b16 %v655, %v654
        %v708 = vpack.c.b16 %v657, %v656
        %v709 = vpack.c.b16 %v659, %v658
        %v710 = vpack.c.b16 %v661, %v660
        %v711 = vpack.c.b16 %v663, %v662
        %v712 = vpack.c.b16 %v665, %v664
        %v713 = vpack.c.b16 %v667, %v666
        %v714 = vpack.c.b16 %v669, %v668
        %v715 = vpack.c.b16 %v671, %v670
        %v716 = vpack.c.b16 %v673, %v672
        %v717 = vpack.c.b16 %v675, %v674
        %v718 = vpack.c.b16 %v677, %v676
        %v719 = vpack.c.b16 %v679, %v678
        %v720 = vpack.c.b16 %v681, %v680
        %v721 = vpack.c.b16 %v683, %v682
        %v722 = vpack.c.b16 %v685, %v684
        %v723 = vpack.c.b16 %v687, %v686
        %v724 = vpack.c.b16 %v689, %v688
        %v725 = vpack.c.b16 %v691, %v690
        %v726 = vpack.c.b16 %v693, %v692
        %v727 = vpack.c.b16 %v695, %v694
        %760 = vmatprep.subr.bf16.mxu0 0
        %761 = vmatpush1.bf16.msra.mxu0 %v703
        %762 = vmatprep.subr.bf16.mxu0 0
        %763 = vmatpush1.bf16.msra.mxu0 %v702
        %764 = vmatprep.subr.bf16.mxu0 0
        %765 = vmatpush1.bf16.msra.mxu0 %v701
        %766 = vmatprep.subr.bf16.mxu0 0
        %767 = vmatpush1.bf16.msra.mxu0 %v700
        %768 = vmatprep.subr.bf16.mxu0 0
        %769 = vmatpush1.bf16.msra.mxu0 %v699
        %770 = vmatprep.subr.bf16.mxu0 0
        %771 = vmatpush1.bf16.msra.mxu0 %v698
        %772 = vmatprep.subr.bf16.mxu0 0
        %773 = vmatpush1.bf16.msra.mxu0 %v697
        %774 = vmatprep.subr.bf16.mxu0 0
        %775 = vmatpush1.bf16.msra.mxu0 %v696
        %776 = vmatprep.subr.bf16.mxu0 0
        %777 = vmatpush2.bf16.msra.mxu0 %v711
        %778 = vmatprep.subr.bf16.mxu0 0
        %779 = vmatpush2.bf16.msra.mxu0 %v710
        %780 = vmatprep.subr.bf16.mxu0 0
        %781 = vmatpush2.bf16.msra.mxu0 %v709
        %782 = vmatprep.subr.bf16.mxu0 0
        %783 = vmatpush2.bf16.msra.mxu0 %v708
        %784 = vmatprep.subr.bf16.mxu0 0
        %785 = vmatpush2.bf16.msra.mxu0 %v707
        %786 = vmatprep.subr.bf16.mxu0 0
        %787 = vmatpush2.bf16.msra.mxu0 %v706
        %788 = vmatprep.subr.bf16.mxu0 0
        %789 = vmatpush2.bf16.msra.mxu0 %v705
        %790 = vmatprep.subr.bf16.mxu0 0
        %791 = vmatpush2.bf16.msra.mxu0 %v704
        %792 = vmatprep.mubr.bf16.mxu0 %v537
        %793 = vmatmul.mubr.bf16.gmra.mxu0 %v536
        %v794 = vpop.f32.mrf.mxu0
        %v795 = vadd.f32 %v534, %v794
        %v796 = vpop.f32.mrf.mxu0
        %v797 = vpop.f32.mrf.mxu0
        %v798 = vadd.f32 %v534, %v797
        %v799 = vpop.f32.mrf.mxu0
        %800 = vmatprep.mubr.bf16.mxu0 %v541
        %801 = vmatmul.mubr.bf16.gmra.mxu0 %v540
        %v802 = vpop.f32.mrf.mxu0
        %v803 = vadd.f32 %v534, %v802
        %v804 = vpop.f32.mrf.mxu0
        %v805 = vpop.f32.mrf.mxu0
        %v806 = vadd.f32 %v534, %v805
        %v807 = vpop.f32.mrf.mxu0
        %808 = vmatprep.mubr.bf16.mxu0 %v545
        %809 = vmatmul.mubr.bf16.gmra.mxu0 %v544
        %v810 = vpop.f32.mrf.mxu0
        %v811 = vadd.f32 %v534, %v810
        %v812 = vpop.f32.mrf.mxu0
        %v813 = vpop.f32.mrf.mxu0
        %v814 = vadd.f32 %v534, %v813
        %v815 = vpop.f32.mrf.mxu0
        %816 = vmatprep.mubr.bf16.mxu0 %v549
        %817 = vmatmul.mubr.bf16.gmra.mxu0 %v548
        %v818 = vpop.f32.mrf.mxu0
        %v819 = vadd.f32 %v534, %v818
        %v820 = vpop.f32.mrf.mxu0
        %v821 = vpop.f32.mrf.mxu0
        %v822 = vadd.f32 %v534, %v821
        %v823 = vpop.f32.mrf.mxu0
        %824 = vdwg.mxu0
        %825 = vmatprep.subr.bf16.mxu0 0
        %826 = vmatpush1.bf16.msra.mxu0 %v719
        %827 = vmatprep.subr.bf16.mxu0 0
        %828 = vmatpush1.bf16.msra.mxu0 %v718
        %829 = vmatprep.subr.bf16.mxu0 0
        %830 = vmatpush1.bf16.msra.mxu0 %v717
        %831 = vmatprep.subr.bf16.mxu0 0
        %832 = vmatpush1.bf16.msra.mxu0 %v716
        %833 = vmatprep.subr.bf16.mxu0 0
        %834 = vmatpush1.bf16.msra.mxu0 %v715
        %835 = vmatprep.subr.bf16.mxu0 0
        %836 = vmatpush1.bf16.msra.mxu0 %v714
        %837 = vmatprep.subr.bf16.mxu0 0
        %838 = vmatpush1.bf16.msra.mxu0 %v713
        %839 = vmatprep.subr.bf16.mxu0 0
        %840 = vmatpush1.bf16.msra.mxu0 %v712
        %841 = vmatprep.subr.bf16.mxu0 0
        %842 = vmatpush2.bf16.msra.mxu0 %v727
        %843 = vmatprep.subr.bf16.mxu0 0
        %844 = vmatpush2.bf16.msra.mxu0 %v726
        %845 = vmatprep.subr.bf16.mxu0 0
        %846 = vmatpush2.bf16.msra.mxu0 %v725
        %847 = vmatprep.subr.bf16.mxu0 0
        %848 = vmatpush2.bf16.msra.mxu0 %v724
        %849 = vmatprep.subr.bf16.mxu0 0
        %850 = vmatpush2.bf16.msra.mxu0 %v723
        %851 = vmatprep.subr.bf16.mxu0 0
        %852 = vmatpush2.bf16.msra.mxu0 %v722
        %853 = vmatprep.subr.bf16.mxu0 0
        %854 = vmatpush2.bf16.msra.mxu0 %v721
        %855 = vmatprep.subr.bf16.mxu0 0
        %856 = vmatpush2.bf16.msra.mxu0 %v720
        %857 = vmatprep.mubr.bf16.mxu0 %v539
        %858 = vmatmul.mubr.bf16.gmra.mxu0 %v538
        %v859 = vpop.f32.mrf.mxu0
        %v860 = vadd.f32 %v795, %v859
        %v861 = vpop.f32.mrf.mxu0
        %v862 = vpop.f32.mrf.mxu0
        %v863 = vadd.f32 %v798, %v862
        %v864 = vpop.f32.mrf.mxu0
        %865 = vmatprep.mubr.bf16.mxu0 %v543
        %866 = vmatmul.mubr.bf16.gmra.mxu0 %v542
        %v867 = vpop.f32.mrf.mxu0
        %v868 = vadd.f32 %v803, %v867
        %v869 = vpop.f32.mrf.mxu0
        %v870 = vpop.f32.mrf.mxu0
        %v871 = vadd.f32 %v806, %v870
        %v872 = vpop.f32.mrf.mxu0
        %873 = vmatprep.mubr.bf16.mxu0 %v547
        %874 = vmatmul.mubr.bf16.gmra.mxu0 %v546
        %v875 = vpop.f32.mrf.mxu0
        %v876 = vadd.f32 %v811, %v875
        %v877 = vpop.f32.mrf.mxu0
        %v878 = vpop.f32.mrf.mxu0
        %v879 = vadd.f32 %v814, %v878
        %v880 = vpop.f32.mrf.mxu0
        %881 = vmatprep.mubr.bf16.mxu0 %v551
        %882 = vmatmul.mubr.bf16.gmra.mxu0 %v550
        %v883 = vpop.f32.mrf.mxu0
        %v884 = vadd.f32 %v819, %v883
        %v885 = vpop.f32.mrf.mxu0
        %v886 = vpop.f32.mrf.mxu0
        %v887 = vadd.f32 %v822, %v886
        %v888 = vpop.f32.mrf.mxu0
        %889 = vdwg.mxu0
        %v890 = vmax.f32 %v860, 0.0
        %v891 = vmax.f32 %v863, 0.0
        %v892 = vmax.f32 %v868, 0.0
        %v893 = vmax.f32 %v871, 0.0
        %v894 = vmax.f32 %v876, 0.0
        %v895 = vmax.f32 %v879, 0.0
        %v896 = vmax.f32 %v884, 0.0
        %v897 = vmax.f32 %v887, 0.0
        %v898 = vpack.c.bf16 %v891, %v890
        %v899 = vpack.c.bf16 %v893, %v892
        %v900 = vpack.c.bf16 %v895, %v894
        %v901 = vpack.c.bf16 %v897, %v896
        %v906 = vunpack.c.l.b16 %v898
        %v907 = vunpack.c.h.b16 %v898
        %v908 = vunpack.c.l.b16 %v899
        %v909 = vunpack.c.h.b16 %v899
        %v910 = vunpack.c.l.b16 %v900
        %v911 = vunpack.c.h.b16 %v900
        %v912 = vunpack.c.l.b16 %v901
        %v913 = vunpack.c.h.b16 %v901
        %v914 = vpack.c.b16 %v906, %v906
        %v915 = vpack.c.b16 %v907, %v907
        %v916 = vpack.c.b16 %v908, %v908
        %v917 = vpack.c.b16 %v909, %v909
        %v918 = vpack.c.b16 %v910, %v910
        %v919 = vpack.c.b16 %v911, %v911
        %v920 = vpack.c.b16 %v912, %v912
        %v921 = vpack.c.b16 %v913, %v913
        %v923 = vshrl.u32 0, 16
        %v925 = vrot.slane %v923, 7
        %v926 = vshll.u32 0, 16
        %v928 = vor.u32 %v925, %v926
        %v930 = vshrl.u32 %v914, 16
        %v932 = vrot.slane %v930, 7
        %v933 = vshll.u32 %v914, 16
        %v935 = vor.u32 %v932, %v933
        %v937 = vshrl.u32 %v915, 16
        %v939 = vrot.slane %v937, 7
        %v940 = vshll.u32 %v915, 16
        %v942 = vor.u32 %v939, %v940
        %v944 = vshrl.u32 %v916, 16
        %v946 = vrot.slane %v944, 7
        %v947 = vshll.u32 %v916, 16
        %v949 = vor.u32 %v946, %v947
        %v951 = vshrl.u32 %v917, 16
        %v953 = vrot.slane %v951, 7
        %v954 = vshll.u32 %v917, 16
        %v956 = vor.u32 %v953, %v954
        %v958 = vshrl.u32 %v918, 16
        %v960 = vrot.slane %v958, 7
        %v961 = vshll.u32 %v918, 16
        %v963 = vor.u32 %v960, %v961
        %v965 = vshrl.u32 %v919, 16
        %v967 = vrot.slane %v965, 7
        %v968 = vshll.u32 %v919, 16
        %v970 = vor.u32 %v967, %v968
        %v972 = vshrl.u32 %v920, 16
        %v974 = vrot.slane %v972, 7
        %v975 = vshll.u32 %v920, 16
        %v977 = vor.u32 %v974, %v975
        %v979 = vshrl.u32 %v921, 16
        %v981 = vrot.slane %v979, 7
        %v982 = vshll.u32 %v921, 16
        %v984 = vor.u32 %v981, %v982
        %vm994 = vcmask 1040384
        %vm995 = vsmask.f32 256
        %vm996 = vmand %vm994, %vm995
        %v997 = vsel %vm996, 0, %v928
        %v998 = vsel %vm996, 0, %v935
        %v999 = vsel %vm996, 0, %v942
        %v1000 = vsel %vm996, 0, %v949
        %v1001 = vsel %vm996, 0, %v956
        %v1002 = vsel %vm996, 0, %v963
        %v1003 = vsel %vm996, 0, %v970
        %v1004 = vsel %vm996, 0, %v977
        %v1005 = vsel %vm996, 0, %v984
        %vm1006 = vcmask 1044480
        %vm1007 = vsmask.f32 4352
        %vm1008 = vmand %vm1006, %vm1007
        %v1009 = vsel %vm1008, %v997, 0
        %v1010 = vsel %vm1008, %v998, 0
        %v1011 = vsel %vm1008, %v999, 0
        %v1012 = vsel %vm1008, %v1000, 0
        %v1013 = vsel %vm1008, %v1001, 0
        %v1014 = vsel %vm1008, %v1002, 0
        %v1015 = vsel %vm1008, %v1003, 0
        %v1016 = vsel %vm1008, %v1004, 0
        %v1017 = vsel %vm1008, %v1005, 0
        %v1019 = vshrl.u32 %v1009, 16
        %v1021 = vshll.u32 %v1009, 16
        %v1023 = vrot.slane %v1021, 1
        %v1024 = vor.u32 %v1019, %v1023
        %v1026 = vshrl.u32 %v1010, 16
        %v1028 = vshll.u32 %v1010, 16
        %v1030 = vrot.slane %v1028, 1
        %v1031 = vor.u32 %v1026, %v1030
        %v1033 = vshrl.u32 %v1011, 16
        %v1035 = vshll.u32 %v1011, 16
        %v1037 = vrot.slane %v1035, 1
        %v1038 = vor.u32 %v1033, %v1037
        %v1040 = vshrl.u32 %v1012, 16
        %v1042 = vshll.u32 %v1012, 16
        %v1044 = vrot.slane %v1042, 1
        %v1045 = vor.u32 %v1040, %v1044
        %v1047 = vshrl.u32 %v1013, 16
        %v1049 = vshll.u32 %v1013, 16
        %v1051 = vrot.slane %v1049, 1
        %v1052 = vor.u32 %v1047, %v1051
        %v1054 = vshrl.u32 %v1014, 16
        %v1056 = vshll.u32 %v1014, 16
        %v1058 = vrot.slane %v1056, 1
        %v1059 = vor.u32 %v1054, %v1058
        %v1061 = vshrl.u32 %v1015, 16
        %v1063 = vshll.u32 %v1015, 16
        %v1065 = vrot.slane %v1063, 1
        %v1066 = vor.u32 %v1061, %v1065
        %v1068 = vshrl.u32 %v1016, 16
        %v1070 = vshll.u32 %v1016, 16
        %v1072 = vrot.slane %v1070, 1
        %v1073 = vor.u32 %v1068, %v1072
        %v1082 = vrot.slane %v1009, 1
        %v1083 = vrot.slane %v1010, 1
        %v1084 = vrot.slane %v1011, 1
        %v1085 = vrot.slane %v1012, 1
        %v1086 = vrot.slane %v1013, 1
        %v1087 = vrot.slane %v1014, 1
        %v1088 = vrot.slane %v1015, 1
        %v1089 = vrot.slane %v1016, 1
        %v1091 = vshrl.u32 %v1017, 16
        %v1093 = vshll.u32 %v1017, 16
        %v1095 = vrot.slane %v1093, 1
        %v1096 = vor.u32 %v1091, %v1095
        %v1098 = vrot.slane %v1017, 1
        %v1099 = vunpack.c.l.b16 %v1009
        %v1100 = vunpack.c.l.b16 %v1024
        %v1101 = vunpack.c.l.b16 %v1082
        %v1102 = vunpack.c.l.b16 %v1010
        %v1103 = vunpack.c.l.b16 %v1031
        %v1104 = vunpack.c.l.b16 %v1083
        %v1105 = vunpack.c.l.b16 %v1011
        %v1106 = vunpack.c.l.b16 %v1038
        %v1107 = vunpack.c.l.b16 %v1084
        %v1108 = vunpack.c.l.b16 %v1012
        %v1109 = vunpack.c.l.b16 %v1045
        %v1110 = vunpack.c.l.b16 %v1085
        %v1111 = vunpack.c.l.b16 %v1013
        %v1112 = vunpack.c.l.b16 %v1052
        %v1113 = vunpack.c.l.b16 %v1086
        %v1114 = vunpack.c.l.b16 %v1014
        %v1115 = vunpack.c.l.b16 %v1059
        %v1116 = vunpack.c.l.b16 %v1087
        %v1117 = vunpack.c.l.b16 %v1015
        %v1118 = vunpack.c.l.b16 %v1066
        %v1119 = vunpack.c.l.b16 %v1088
        %v1120 = vunpack.c.l.b16 %v1016
        %v1121 = vunpack.c.l.b16 %v1073
        %v1122 = vunpack.c.l.b16 %v1089
        %v1123 = vunpack.c.l.b16 %v1017
        %v1124 = vunpack.c.l.b16 %v1096
        %v1125 = vunpack.c.l.b16 %v1098
        %v1126 = vld [vmem:[%s3] sm:$0xf]
        %v1127 = vld [vmem:[%s3 + $0x4] sm:$0xf]
        %v1128 = vld [vmem:[%s3 + $0x8] sm:$0xf]
        %v1129 = vld [vmem:[%s3 + $0xc] sm:$0xf]
        %v1130 = vld [vmem:[%s3 + $0x10] sm:$0xf]
        %v1131 = vld [vmem:[%s3 + $0x14] sm:$0xf]
        %v1132 = vld [vmem:[%s3 + $0x18] sm:$0xf]
        %v1133 = vld [vmem:[%s3 + $0x1c] sm:$0xf]
        %v1134 = vld [vmem:[%s3 + $0x20] sm:$0xf]
        %v1135 = vld [vmem:[%s3 + $0x24] sm:$0xf]
        %v1136 = vld [vmem:[%s3 + $0x28] sm:$0xf]
        %v1137 = vld [vmem:[%s3 + $0x2c] sm:$0xf]
        %v1138 = vld [vmem:[%s3 + $0x30] sm:$0xf]
        %v1139 = vld [vmem:[%s3 + $0x34] sm:$0xf]
        %v1140 = vld [vmem:[%s3 + $0x38] sm:$0xf]
        %v1141 = vld [vmem:[%s3 + $0x3c] sm:$0xf]
        %v1142 = vld [vmem:[%s3 + $0x40] sm:$0xf]
        %v1143 = vld [vmem:[%s3 + $0x44] sm:$0xf]
        %v1144 = vld [vmem:[%s3 + $0x48] sm:$0xf]
        %v1145 = vld [vmem:[%s3 + $0x4c] sm:$0xf]
        %v1146 = vld [vmem:[%s3 + $0x50] sm:$0xf]
        %v1147 = vld [vmem:[%s3 + $0x54] sm:$0xf]
        %v1148 = vld [vmem:[%s3 + $0x58] sm:$0xf]
        %v1149 = vld [vmem:[%s3 + $0x5c] sm:$0xf]
        %v1150 = vld [vmem:[%s3 + $0x60] sm:$0xf]
        %v1151 = vld [vmem:[%s3 + $0x64] sm:$0xf]
        %v1152 = vld [vmem:[%s3 + $0x68] sm:$0xf]
        %v1153 = vld [vmem:[%s3 + $0x6c] sm:$0xf]
        %v1154 = vld [vmem:[%s3 + $0x70] sm:$0xf]
        %v1155 = vld [vmem:[%s3 + $0x74] sm:$0xf]
        %v1156 = vld [vmem:[%s3 + $0x78] sm:$0xf]
        %v1157 = vld [vmem:[%s3 + $0x7c] sm:$0xf]
        %v1158 = vld [vmem:[%s3 + $0x80] sm:$0xf]
        %v1159 = vld [vmem:[%s3 + $0x84] sm:$0xf]
        %v1160 = vld [vmem:[%s3 + $0x88] sm:$0xf]
        %v1161 = vld [vmem:[%s3 + $0x8c] sm:$0xf]
        %v1162 = vld [vmem:[%s3 + $0x90] sm:$0xf]
        %v1163 = vld [vmem:[%s3 + $0x94] sm:$0xf]
        %v1164 = vld [vmem:[%s3 + $0x98] sm:$0xf]
        %v1165 = vld [vmem:[%s3 + $0x9c] sm:$0xf]
        %v1166 = vld [vmem:[%s3 + $0xa0] sm:$0xf]
        %v1167 = vld [vmem:[%s3 + $0xa4] sm:$0xf]
        %v1168 = vld [vmem:[%s3 + $0xa8] sm:$0xf]
        %v1169 = vld [vmem:[%s3 + $0xac] sm:$0xf]
        %v1170 = vld [vmem:[%s3 + $0xb0] sm:$0xf]
        %v1171 = vld [vmem:[%s3 + $0xb4] sm:$0xf]
        %v1172 = vld [vmem:[%s3 + $0xb8] sm:$0xf]
        %v1173 = vld [vmem:[%s3 + $0xbc] sm:$0xf]
        %v1174 = vld [vmem:[%s3 + $0xc0] sm:$0xf]
        %v1175 = vld [vmem:[%s3 + $0xc4] sm:$0xf]
        %v1176 = vld [vmem:[%s3 + $0xc8] sm:$0xf]
        %v1177 = vld [vmem:[%s3 + $0xcc] sm:$0xf]
        %v1178 = vld [vmem:[%s3 + $0xd0] sm:$0xf]
        %v1179 = vld [vmem:[%s3 + $0xd4] sm:$0xf]
        %v1180 = vld [vmem:[%s3 + $0xd8] sm:$0xf]
        %v1181 = vld [vmem:[%s3 + $0xdc] sm:$0xf]
        %v1182 = vld [vmem:[%s3 + $0xe0] sm:$0xf]
        %v1183 = vld [vmem:[%s3 + $0xe4] sm:$0xf]
        %v1184 = vld [vmem:[%s3 + $0xe8] sm:$0xf]
        %v1185 = vld [vmem:[%s3 + $0xec] sm:$0xf]
        %v1186 = vld [vmem:[%s3 + $0xf0] sm:$0xf]
        %v1187 = vld [vmem:[%s3 + $0xf4] sm:$0xf]
        %v1188 = vld [vmem:[%s3 + $0xf8] sm:$0xf]
        %v1189 = vld [vmem:[%s3 + $0xfc] sm:$0xf]
        %v1190 = vld [vmem:[%s3 + $0x100] sm:$0xf]
        %v1191 = vld [vmem:[%s3 + $0x104] sm:$0xf]
        %v1192 = vld [vmem:[%s3 + $0x108] sm:$0xf]
        %v1193 = vld [vmem:[%s3 + $0x10c] sm:$0xf]
        %v1194 = vld [vmem:[%s3 + $0x110] sm:$0xf]
        %v1195 = vld [vmem:[%s3 + $0x114] sm:$0xf]
        %v1196 = vld [vmem:[%s3 + $0x118] sm:$0xf]
        %v1197 = vld [vmem:[%s3 + $0x11c] sm:$0xf]
        %v1198 = vld [vmem:[%s3 + $0x120] sm:$0xf]
        %v1199 = vld [vmem:[%s3 + $0x124] sm:$0xf]
        %v1200 = vld [vmem:[%s3 + $0x128] sm:$0xf]
        %v1201 = vld [vmem:[%s3 + $0x12c] sm:$0xf]
        %v1202 = vld [vmem:[%s3 + $0x130] sm:$0xf]
        %v1203 = vld [vmem:[%s3 + $0x134] sm:$0xf]
        %v1204 = vld [vmem:[%s3 + $0x138] sm:$0xf]
        %v1205 = vld [vmem:[%s3 + $0x13c] sm:$0xf]
        %v1206 = vld [vmem:[%s3 + $0x140] sm:$0xf]
        %v1207 = vld [vmem:[%s3 + $0x144] sm:$0xf]
        %v1208 = vld [vmem:[%s3 + $0x148] sm:$0xf]
        %v1209 = vld [vmem:[%s3 + $0x14c] sm:$0xf]
        %v1210 = vld [vmem:[%s3 + $0x150] sm:$0xf]
        %v1211 = vld [vmem:[%s3 + $0x154] sm:$0xf]
        %v1212 = vld [vmem:[%s3 + $0x158] sm:$0xf]
        %v1213 = vld [vmem:[%s3 + $0x15c] sm:$0xf]
        %v1214 = vld [vmem:[%s3 + $0x160] sm:$0xf]
        %v1215 = vld [vmem:[%s3 + $0x164] sm:$0xf]
        %v1216 = vld [vmem:[%s3 + $0x168] sm:$0xf]
        %v1217 = vld [vmem:[%s3 + $0x16c] sm:$0xf]
        %v1218 = vld [vmem:[%s3 + $0x170] sm:$0xf]
        %v1219 = vld [vmem:[%s3 + $0x174] sm:$0xf]
        %v1220 = vld [vmem:[%s3 + $0x178] sm:$0xf]
        %v1221 = vld [vmem:[%s3 + $0x17c] sm:$0xf]
        %v1222 = vld [vmem:[%s3 + $0x180] sm:$0xf]
        %v1223 = vld [vmem:[%s3 + $0x184] sm:$0xf]
        %v1224 = vld [vmem:[%s3 + $0x188] sm:$0xf]
        %v1225 = vld [vmem:[%s3 + $0x18c] sm:$0xf]
        %v1226 = vld [vmem:[%s3 + $0x190] sm:$0xf]
        %v1227 = vld [vmem:[%s3 + $0x194] sm:$0xf]
        %v1228 = vld [vmem:[%s3 + $0x198] sm:$0xf]
        %v1229 = vld [vmem:[%s3 + $0x19c] sm:$0xf]
        %v1230 = vld [vmem:[%s3 + $0x1a0] sm:$0xf]
        %v1231 = vld [vmem:[%s3 + $0x1a4] sm:$0xf]
        %v1232 = vld [vmem:[%s3 + $0x1a8] sm:$0xf]
        %v1233 = vld [vmem:[%s3 + $0x1ac] sm:$0xf]
        %v1234 = vld [vmem:[%s3 + $0x1b0] sm:$0xf]
        %v1235 = vld [vmem:[%s3 + $0x1b4] sm:$0xf]
        %v1236 = vld [vmem:[%s3 + $0x1b8] sm:$0xf]
        %v1237 = vld [vmem:[%s3 + $0x1bc] sm:$0xf]
        %v1238 = vld [vmem:[%s3 + $0x1c0] sm:$0xf]
        %v1239 = vld [vmem:[%s3 + $0x1c4] sm:$0xf]
        %v1240 = vld [vmem:[%s3 + $0x1c8] sm:$0xf]
        %v1241 = vld [vmem:[%s3 + $0x1cc] sm:$0xf]
        %v1242 = vld [vmem:[%s3 + $0x1d0] sm:$0xf]
        %v1243 = vld [vmem:[%s3 + $0x1d4] sm:$0xf]
        %v1244 = vld [vmem:[%s3 + $0x1d8] sm:$0xf]
        %v1245 = vld [vmem:[%s3 + $0x1dc] sm:$0xf]
        %v1246 = vld [vmem:[%s3 + $0x1e0] sm:$0xf]
        %v1247 = vld [vmem:[%s3 + $0x1e4] sm:$0xf]
        %v1248 = vld [vmem:[%s3 + $0x1e8] sm:$0xf]
        %v1249 = vld [vmem:[%s3 + $0x1ec] sm:$0xf]
        %v1250 = vld [vmem:[%s3 + $0x1f0] sm:$0xf]
        %v1251 = vld [vmem:[%s3 + $0x1f4] sm:$0xf]
        %v1252 = vld [vmem:[%s3 + $0x1f8] sm:$0xf]
        %v1253 = vld [vmem:[%s3 + $0x1fc] sm:$0xf]
        %v1254 = vld [vmem:[%s3 + $0x200] sm:$0xf]
        %v1255 = vld [vmem:[%s3 + $0x204] sm:$0xf]
        %v1256 = vld [vmem:[%s3 + $0x208] sm:$0xf]
        %v1257 = vld [vmem:[%s3 + $0x20c] sm:$0xf]
        %v1258 = vld [vmem:[%s3 + $0x210] sm:$0xf]
        %v1259 = vld [vmem:[%s3 + $0x214] sm:$0xf]
        %v1260 = vld [vmem:[%s3 + $0x218] sm:$0xf]
        %v1261 = vld [vmem:[%s3 + $0x21c] sm:$0xf]
        %v1262 = vld [vmem:[%s3 + $0x220] sm:$0xf]
        %v1263 = vld [vmem:[%s3 + $0x224] sm:$0xf]
        %v1264 = vld [vmem:[%s3 + $0x228] sm:$0xf]
        %v1265 = vld [vmem:[%s3 + $0x22c] sm:$0xf]
        %v1266 = vld [vmem:[%s3 + $0x230] sm:$0xf]
        %v1267 = vld [vmem:[%s3 + $0x234] sm:$0xf]
        %v1268 = vld [vmem:[%s3 + $0x238] sm:$0xf]
        %v1269 = vld [vmem:[%s3 + $0x23c] sm:$0xf]
        %v1270 = vld [vmem:[%s3 + $0x240] sm:$0xf]
        %v1271 = vld [vmem:[%s3 + $0x244] sm:$0xf]
        %v1272 = vld [vmem:[%s3 + $0x248] sm:$0xf]
        %v1273 = vld [vmem:[%s3 + $0x24c] sm:$0xf]
        %v1274 = vld [vmem:[%s3 + $0x250] sm:$0xf]
        %v1275 = vld [vmem:[%s3 + $0x254] sm:$0xf]
        %v1276 = vld [vmem:[%s3 + $0x258] sm:$0xf]
        %v1277 = vld [vmem:[%s3 + $0x25c] sm:$0xf]
        %v1278 = vld [vmem:[%s3 + $0x260] sm:$0xf]
        %v1279 = vld [vmem:[%s3 + $0x264] sm:$0xf]
        %v1280 = vld [vmem:[%s3 + $0x268] sm:$0xf]
        %v1281 = vld [vmem:[%s3 + $0x26c] sm:$0xf]
        %v1282 = vld [vmem:[%s3 + $0x270] sm:$0xf]
        %v1283 = vld [vmem:[%s3 + $0x274] sm:$0xf]
        %v1284 = vld [vmem:[%s3 + $0x278] sm:$0xf]
        %v1285 = vld [vmem:[%s3 + $0x27c] sm:$0xf]
        %v1286 = vld [vmem:[%s4] sm:$0x1]
        %v1288 = vlaneseq
        %v1289 = vshrl.u32 %v1288, 7
        %v1290 = vsub.s32 0, %v1289
        %v1291 = vrot.slane %v1286, %v1290
        %v1293 = vpack.c.b16 %v1102, %v1099
        %v1294 = vpack.c.b16 %v1103, %v1100
        %v1295 = vpack.c.b16 %v1104, %v1101
        %v1296 = vpack.c.b16 %v1105, %v1102
        %v1297 = vpack.c.b16 %v1106, %v1103
        %v1298 = vpack.c.b16 %v1107, %v1104
        %v1299 = vpack.c.b16 %v1108, %v1105
        %v1300 = vpack.c.b16 %v1109, %v1106
        %v1301 = vpack.c.b16 %v1110, %v1107
        %v1302 = vpack.c.b16 %v1111, %v1108
        %v1303 = vpack.c.b16 %v1112, %v1109
        %v1304 = vpack.c.b16 %v1113, %v1110
        %v1305 = vpack.c.b16 %v1114, %v1111
        %v1306 = vpack.c.b16 %v1115, %v1112
        %v1307 = vpack.c.b16 %v1116, %v1113
        %v1308 = vpack.c.b16 %v1117, %v1114
        %v1309 = vpack.c.b16 %v1118, %v1115
        %v1310 = vpack.c.b16 %v1119, %v1116
        %v1311 = vpack.c.b16 %v1120, %v1117
        %v1312 = vpack.c.b16 %v1121, %v1118
        %v1313 = vpack.c.b16 %v1122, %v1119
        %v1314 = vpack.c.b16 %v1123, %v1120
        %v1315 = vpack.c.b16 %v1124, %v1121
        %v1316 = vpack.c.b16 %v1125, %v1122
        %v1317 = vpack.c.b16 %v1099, %v1123
        %v1318 = vpack.c.b16 %v1100, %v1124
        %v1319 = vpack.c.b16 %v1101, %v1125
        %v1507 = vunpack.c.l.b16 %v1126
        %v1508 = vunpack.c.l.b16 %v1127
        %v1509 = vunpack.c.l.b16 %v1128
        %v1510 = vunpack.c.l.b16 %v1129
        %v1511 = vunpack.c.l.b16 %v1130
        %v1512 = vunpack.c.l.b16 %v1131
        %v1513 = vunpack.c.l.b16 %v1132
        %v1514 = vunpack.c.l.b16 %v1133
        %v1515 = vunpack.c.l.b16 %v1134
        %v1516 = vunpack.c.l.b16 %v1135
        %v1517 = vunpack.c.l.b16 %v1136
        %v1518 = vunpack.c.l.b16 %v1137
        %v1519 = vunpack.c.l.b16 %v1138
        %v1520 = vunpack.c.l.b16 %v1139
        %v1521 = vunpack.c.l.b16 %v1140
        %v1522 = vunpack.c.l.b16 %v1141
        %v1523 = vunpack.c.l.b16 %v1142
        %v1524 = vunpack.c.l.b16 %v1143
        %v1525 = vunpack.c.l.b16 %v1144
        %v1526 = vunpack.c.l.b16 %v1145
        %v1527 = vunpack.c.l.b16 %v1146
        %v1528 = vunpack.c.l.b16 %v1147
        %v1529 = vunpack.c.l.b16 %v1148
        %v1530 = vunpack.c.l.b16 %v1149
        %v1531 = vunpack.c.l.b16 %v1150
        %v1532 = vunpack.c.l.b16 %v1151
        %v1533 = vunpack.c.l.b16 %v1152
        %v1534 = vunpack.c.l.b16 %v1153
        %v1535 = vunpack.c.l.b16 %v1154
        %v1536 = vunpack.c.l.b16 %v1155
        %v1537 = vunpack.c.l.b16 %v1156
        %v1538 = vunpack.c.l.b16 %v1157
        %v1539 = vunpack.c.l.b16 %v1158
        %v1540 = vunpack.c.l.b16 %v1159
        %v1541 = vunpack.c.l.b16 %v1160
        %v1542 = vunpack.c.l.b16 %v1161
        %v1543 = vunpack.c.l.b16 %v1162
        %v1544 = vunpack.c.l.b16 %v1163
        %v1545 = vunpack.c.l.b16 %v1164
        %v1546 = vunpack.c.l.b16 %v1165
        %v1547 = vunpack.c.l.b16 %v1166
        %v1548 = vunpack.c.l.b16 %v1167
        %v1549 = vunpack.c.l.b16 %v1168
        %v1550 = vunpack.c.l.b16 %v1169
        %v1551 = vunpack.c.l.b16 %v1170
        %v1552 = vunpack.c.l.b16 %v1171
        %v1553 = vunpack.c.l.b16 %v1172
        %v1554 = vunpack.c.l.b16 %v1173
        %v1555 = vunpack.c.l.b16 %v1174
        %v1556 = vunpack.c.l.b16 %v1175
        %v1557 = vunpack.c.l.b16 %v1176
        %v1558 = vunpack.c.l.b16 %v1177
        %v1559 = vunpack.c.l.b16 %v1178
        %v1560 = vunpack.c.l.b16 %v1179
        %v1561 = vunpack.c.l.b16 %v1180
        %v1562 = vunpack.c.l.b16 %v1181
        %v1563 = vunpack.c.l.b16 %v1182
        %v1564 = vunpack.c.l.b16 %v1183
        %v1565 = vunpack.c.l.b16 %v1184
        %v1566 = vunpack.c.l.b16 %v1185
        %v1567 = vunpack.c.l.b16 %v1186
        %v1568 = vunpack.c.l.b16 %v1187
        %v1569 = vunpack.c.l.b16 %v1188
        %v1570 = vunpack.c.l.b16 %v1189
        %v1571 = vunpack.c.l.b16 %v1190
        %v1572 = vunpack.c.l.b16 %v1191
        %v1573 = vunpack.c.l.b16 %v1192
        %v1574 = vunpack.c.l.b16 %v1193
        %v1575 = vunpack.c.l.b16 %v1194
        %v1576 = vunpack.c.l.b16 %v1195
        %v1577 = vunpack.c.l.b16 %v1196
        %v1578 = vunpack.c.l.b16 %v1197
        %v1579 = vunpack.c.l.b16 %v1198
        %v1580 = vunpack.c.l.b16 %v1199
        %v1581 = vunpack.c.l.b16 %v1200
        %v1582 = vunpack.c.l.b16 %v1201
        %v1583 = vunpack.c.l.b16 %v1202
        %v1584 = vunpack.c.l.b16 %v1203
        %v1585 = vunpack.c.l.b16 %v1204
        %v1586 = vunpack.c.l.b16 %v1205
        %v1587 = vunpack.c.l.b16 %v1206
        %v1588 = vunpack.c.l.b16 %v1207
        %v1589 = vunpack.c.l.b16 %v1208
        %v1590 = vunpack.c.l.b16 %v1209
        %v1591 = vunpack.c.l.b16 %v1210
        %v1592 = vunpack.c.l.b16 %v1211
        %v1593 = vunpack.c.l.b16 %v1212
        %v1594 = vunpack.c.l.b16 %v1213
        %v1595 = vunpack.c.l.b16 %v1214
        %v1596 = vunpack.c.l.b16 %v1215
        %v1597 = vunpack.c.l.b16 %v1216
        %v1598 = vunpack.c.l.b16 %v1217
        %v1599 = vunpack.c.l.b16 %v1218
        %v1600 = vunpack.c.l.b16 %v1219
        %v1601 = vunpack.c.l.b16 %v1220
        %v1602 = vunpack.c.l.b16 %v1221
        %v1603 = vunpack.c.l.b16 %v1222
        %v1604 = vunpack.c.l.b16 %v1223
        %v1605 = vunpack.c.l.b16 %v1224
        %v1606 = vunpack.c.l.b16 %v1225
        %v1607 = vunpack.c.l.b16 %v1226
        %v1608 = vunpack.c.l.b16 %v1227
        %v1609 = vunpack.c.l.b16 %v1228
        %v1610 = vunpack.c.l.b16 %v1229
        %v1611 = vunpack.c.l.b16 %v1230
        %v1612 = vunpack.c.l.b16 %v1231
        %v1613 = vunpack.c.l.b16 %v1232
        %v1614 = vunpack.c.l.b16 %v1233
        %v1615 = vunpack.c.l.b16 %v1234
        %v1616 = vunpack.c.l.b16 %v1235
        %v1617 = vunpack.c.l.b16 %v1236
        %v1618 = vunpack.c.l.b16 %v1237
        %v1619 = vunpack.c.l.b16 %v1238
        %v1620 = vunpack.c.l.b16 %v1239
        %v1621 = vunpack.c.l.b16 %v1240
        %v1622 = vunpack.c.l.b16 %v1241
        %v1623 = vunpack.c.l.b16 %v1242
        %v1624 = vunpack.c.l.b16 %v1243
        %v1625 = vunpack.c.l.b16 %v1244
        %v1626 = vunpack.c.l.b16 %v1245
        %v1627 = vunpack.c.l.b16 %v1246
        %v1628 = vunpack.c.l.b16 %v1247
        %v1629 = vunpack.c.l.b16 %v1248
        %v1630 = vunpack.c.l.b16 %v1249
        %v1631 = vunpack.c.l.b16 %v1250
        %v1632 = vunpack.c.l.b16 %v1251
        %v1633 = vunpack.c.l.b16 %v1252
        %v1634 = vunpack.c.l.b16 %v1253
        %v1635 = vunpack.c.l.b16 %v1254
        %v1636 = vunpack.c.l.b16 %v1255
        %v1637 = vunpack.c.l.b16 %v1256
        %v1638 = vunpack.c.l.b16 %v1257
        %v1639 = vunpack.c.l.b16 %v1258
        %v1640 = vunpack.c.l.b16 %v1259
        %v1641 = vunpack.c.l.b16 %v1260
        %v1642 = vunpack.c.l.b16 %v1261
        %v1643 = vunpack.c.l.b16 %v1262
        %v1644 = vunpack.c.l.b16 %v1263
        %v1645 = vunpack.c.l.b16 %v1264
        %v1646 = vunpack.c.l.b16 %v1265
        %v1647 = vunpack.c.l.b16 %v1266
        %v1648 = vunpack.c.l.b16 %v1267
        %v1649 = vunpack.c.l.b16 %v1268
        %v1650 = vunpack.c.l.b16 %v1269
        %v1651 = vunpack.c.l.b16 %v1270
        %v1652 = vunpack.c.l.b16 %v1271
        %v1653 = vunpack.c.l.b16 %v1272
        %v1654 = vunpack.c.l.b16 %v1273
        %v1655 = vunpack.c.l.b16 %v1274
        %v1656 = vunpack.c.l.b16 %v1275
        %v1657 = vunpack.c.l.b16 %v1276
        %v1658 = vunpack.c.l.b16 %v1277
        %v1659 = vunpack.c.l.b16 %v1278
        %v1660 = vunpack.c.l.b16 %v1279
        %v1661 = vunpack.c.l.b16 %v1280
        %v1662 = vunpack.c.l.b16 %v1281
        %v1663 = vunpack.c.l.b16 %v1282
        %v1664 = vunpack.c.l.b16 %v1283
        %v1665 = vunpack.c.l.b16 %v1284
        %v1666 = vunpack.c.l.b16 %v1285
        %v1667 = vpack.c.b16 %v1508, %v1507
        %v1668 = vpack.c.b16 %v1510, %v1509
        %v1669 = vpack.c.b16 %v1512, %v1511
        %v1670 = vpack.c.b16 %v1514, %v1513
        %v1671 = vpack.c.b16 %v1516, %v1515
        %v1672 = vpack.c.b16 %v1518, %v1517
        %v1673 = vpack.c.b16 %v1520, %v1519
        %v1674 = vpack.c.b16 %v1522, %v1521
        %v1675 = vpack.c.b16 %v1524, %v1523
        %v1676 = vpack.c.b16 %v1526, %v1525
        %v1677 = vpack.c.b16 %v1528, %v1527
        %v1678 = vpack.c.b16 %v1530, %v1529
        %v1679 = vpack.c.b16 %v1532, %v1531
        %v1680 = vpack.c.b16 %v1534, %v1533
        %v1681 = vpack.c.b16 %v1536, %v1535
        %v1682 = vpack.c.b16 %v1538, %v1537
        %v1683 = vpack.c.b16 %v1540, %v1539
        %v1684 = vpack.c.b16 %v1542, %v1541
        %v1685 = vpack.c.b16 %v1544, %v1543
        %v1686 = vpack.c.b16 %v1546, %v1545
        %v1687 = vpack.c.b16 %v1548, %v1547
        %v1688 = vpack.c.b16 %v1550, %v1549
        %v1689 = vpack.c.b16 %v1552, %v1551
        %v1690 = vpack.c.b16 %v1554, %v1553
        %v1691 = vpack.c.b16 %v1556, %v1555
        %v1692 = vpack.c.b16 %v1558, %v1557
        %v1693 = vpack.c.b16 %v1560, %v1559
        %v1694 = vpack.c.b16 %v1562, %v1561
        %v1695 = vpack.c.b16 %v1564, %v1563
        %v1696 = vpack.c.b16 %v1566, %v1565
        %v1697 = vpack.c.b16 %v1568, %v1567
        %v1698 = vpack.c.b16 %v1570, %v1569
        %v1699 = vpack.c.b16 %v1572, %v1571
        %v1700 = vpack.c.b16 %v1574, %v1573
        %v1701 = vpack.c.b16 %v1576, %v1575
        %v1702 = vpack.c.b16 %v1578, %v1577
        %v1703 = vpack.c.b16 %v1580, %v1579
        %v1704 = vpack.c.b16 %v1582, %v1581
        %v1705 = vpack.c.b16 %v1584, %v1583
        %v1706 = vpack.c.b16 %v1586, %v1585
        %v1707 = vpack.c.b16 %v1588, %v1587
        %v1708 = vpack.c.b16 %v1590, %v1589
        %v1709 = vpack.c.b16 %v1592, %v1591
        %v1710 = vpack.c.b16 %v1594, %v1593
        %v1711 = vpack.c.b16 %v1596, %v1595
        %v1712 = vpack.c.b16 %v1598, %v1597
        %v1713 = vpack.c.b16 %v1600, %v1599
        %v1714 = vpack.c.b16 %v1602, %v1601
        %v1715 = vpack.c.b16 %v1604, %v1603
        %v1716 = vpack.c.b16 %v1606, %v1605
        %v1717 = vpack.c.b16 %v1608, %v1607
        %v1718 = vpack.c.b16 %v1610, %v1609
        %v1719 = vpack.c.b16 %v1612, %v1611
        %v1720 = vpack.c.b16 %v1614, %v1613
        %v1721 = vpack.c.b16 %v1616, %v1615
        %v1722 = vpack.c.b16 %v1618, %v1617
        %v1723 = vpack.c.b16 %v1620, %v1619
        %v1724 = vpack.c.b16 %v1622, %v1621
        %v1725 = vpack.c.b16 %v1624, %v1623
        %v1726 = vpack.c.b16 %v1626, %v1625
        %v1727 = vpack.c.b16 %v1628, %v1627
        %v1728 = vpack.c.b16 %v1630, %v1629
        %v1729 = vpack.c.b16 %v1632, %v1631
        %v1730 = vpack.c.b16 %v1634, %v1633
        %v1731 = vpack.c.b16 %v1636, %v1635
        %v1732 = vpack.c.b16 %v1638, %v1637
        %v1733 = vpack.c.b16 %v1640, %v1639
        %v1734 = vpack.c.b16 %v1642, %v1641
        %v1735 = vpack.c.b16 %v1644, %v1643
        %v1736 = vpack.c.b16 %v1646, %v1645
        %v1737 = vpack.c.b16 %v1648, %v1647
        %v1738 = vpack.c.b16 %v1650, %v1649
        %v1739 = vpack.c.b16 %v1652, %v1651
        %v1740 = vpack.c.b16 %v1654, %v1653
        %v1741 = vpack.c.b16 %v1656, %v1655
        %v1742 = vpack.c.b16 %v1658, %v1657
        %v1743 = vpack.c.b16 %v1660, %v1659
        %v1744 = vpack.c.b16 %v1662, %v1661
        %v1745 = vpack.c.b16 %v1664, %v1663
        %v1746 = vpack.c.b16 %v1666, %v1665
        %1827 = vmatprep.subr.bf16.mxu0 0
        %1828 = vmatpush1.bf16.msra.mxu0 %v1674
        %1829 = vmatprep.subr.bf16.mxu0 0
        %1830 = vmatpush1.bf16.msra.mxu0 %v1673
        %1831 = vmatprep.subr.bf16.mxu0 0
        %1832 = vmatpush1.bf16.msra.mxu0 %v1672
        %1833 = vmatprep.subr.bf16.mxu0 0
        %1834 = vmatpush1.bf16.msra.mxu0 %v1671
        %1835 = vmatprep.subr.bf16.mxu0 0
        %1836 = vmatpush1.bf16.msra.mxu0 %v1670
        %1837 = vmatprep.subr.bf16.mxu0 0
        %1838 = vmatpush1.bf16.msra.mxu0 %v1669
        %1839 = vmatprep.subr.bf16.mxu0 0
        %1840 = vmatpush1.bf16.msra.mxu0 %v1668
        %1841 = vmatprep.subr.bf16.mxu0 0
        %1842 = vmatpush1.bf16.msra.mxu0 %v1667
        %1843 = vmatprep.subr.bf16.mxu0 0
        %1844 = vmatpush2.bf16.msra.mxu0 %v1682
        %1845 = vmatprep.subr.bf16.mxu0 0
        %1846 = vmatpush2.bf16.msra.mxu0 %v1681
        %1847 = vmatprep.subr.bf16.mxu0 0
        %1848 = vmatpush2.bf16.msra.mxu0 %v1680
        %1849 = vmatprep.subr.bf16.mxu0 0
        %1850 = vmatpush2.bf16.msra.mxu0 %v1679
        %1851 = vmatprep.subr.bf16.mxu0 0
        %1852 = vmatpush2.bf16.msra.mxu0 %v1678
        %1853 = vmatprep.subr.bf16.mxu0 0
        %1854 = vmatpush2.bf16.msra.mxu0 %v1677
        %1855 = vmatprep.subr.bf16.mxu0 0
        %1856 = vmatpush2.bf16.msra.mxu0 %v1676
        %1857 = vmatprep.subr.bf16.mxu0 0
        %1858 = vmatpush2.bf16.msra.mxu0 %v1675
        %1859 = vmatprep.mubr.bf16.mxu0 %v1294
        %1860 = vmatmul.mubr.bf16.gmra.mxu0 %v1293
        %v1861 = vpop.f32.mrf.mxu0
        %v1862 = vadd.f32 %v1291, %v1861
        %v1863 = vpop.f32.mrf.mxu0
        %v1864 = vpop.f32.mrf.mxu0
        %v1865 = vadd.f32 %v1291, %v1864
        %v1866 = vpop.f32.mrf.mxu0
        %1867 = vmatprep.mubr.bf16.mxu0 %v1300
        %1868 = vmatmul.mubr.bf16.gmra.mxu0 %v1299
        %v1869 = vpop.f32.mrf.mxu0
        %v1870 = vadd.f32 %v1291, %v1869
        %v1871 = vpop.f32.mrf.mxu0
        %v1872 = vpop.f32.mrf.mxu0
        %v1873 = vadd.f32 %v1291, %v1872
        %v1874 = vpop.f32.mrf.mxu0
        %1875 = vmatprep.mubr.bf16.mxu0 %v1306
        %1876 = vmatmul.mubr.bf16.gmra.mxu0 %v1305
        %v1877 = vpop.f32.mrf.mxu0
        %v1878 = vadd.f32 %v1291, %v1877
        %v1879 = vpop.f32.mrf.mxu0
        %v1880 = vpop.f32.mrf.mxu0
        %v1881 = vadd.f32 %v1291, %v1880
        %v1882 = vpop.f32.mrf.mxu0
        %1883 = vmatprep.mubr.bf16.mxu0 %v1312
        %1884 = vmatmul.mubr.bf16.gmra.mxu0 %v1311
        %v1885 = vpop.f32.mrf.mxu0
        %v1886 = vadd.f32 %v1291, %v1885
        %v1887 = vpop.f32.mrf.mxu0
        %v1888 = vpop.f32.mrf.mxu0
        %v1889 = vadd.f32 %v1291, %v1888
        %v1890 = vpop.f32.mrf.mxu0
        %1891 = vdwg.mxu0
        %1892 = vmatprep.subr.bf16.mxu0 0
        %1893 = vmatpush1.bf16.msra.mxu0 %v1690
        %1894 = vmatprep.subr.bf16.mxu0 0
        %1895 = vmatpush1.bf16.msra.mxu0 %v1689
        %1896 = vmatprep.subr.bf16.mxu0 0
        %1897 = vmatpush1.bf16.msra.mxu0 %v1688
        %1898 = vmatprep.subr.bf16.mxu0 0
        %1899 = vmatpush1.bf16.msra.mxu0 %v1687
        %1900 = vmatprep.subr.bf16.mxu0 0
        %1901 = vmatpush1.bf16.msra.mxu0 %v1686
        %1902 = vmatprep.subr.bf16.mxu0 0
        %1903 = vmatpush1.bf16.msra.mxu0 %v1685
        %1904 = vmatprep.subr.bf16.mxu0 0
        %1905 = vmatpush1.bf16.msra.mxu0 %v1684
        %1906 = vmatprep.subr.bf16.mxu0 0
        %1907 = vmatpush1.bf16.msra.mxu0 %v1683
        %1908 = vmatprep.subr.bf16.mxu0 0
        %1909 = vmatpush2.bf16.msra.mxu0 %v1698
        %1910 = vmatprep.subr.bf16.mxu0 0
        %1911 = vmatpush2.bf16.msra.mxu0 %v1697
        %1912 = vmatprep.subr.bf16.mxu0 0
        %1913 = vmatpush2.bf16.msra.mxu0 %v1696
        %1914 = vmatprep.subr.bf16.mxu0 0
        %1915 = vmatpush2.bf16.msra.mxu0 %v1695
        %1916 = vmatprep.subr.bf16.mxu0 0
        %1917 = vmatpush2.bf16.msra.mxu0 %v1694
        %1918 = vmatprep.subr.bf16.mxu0 0
        %1919 = vmatpush2.bf16.msra.mxu0 %v1693
        %1920 = vmatprep.subr.bf16.mxu0 0
        %1921 = vmatpush2.bf16.msra.mxu0 %v1692
        %1922 = vmatprep.subr.bf16.mxu0 0
        %1923 = vmatpush2.bf16.msra.mxu0 %v1691
        %1924 = vmatprep.mubr.bf16.mxu0 %v1296
        %1925 = vmatmul.mubr.bf16.gmra.mxu0 %v1295
        %v1926 = vpop.f32.mrf.mxu0
        %v1927 = vadd.f32 %v1862, %v1926
        %v1928 = vpop.f32.mrf.mxu0
        %v1929 = vpop.f32.mrf.mxu0
        %v1930 = vadd.f32 %v1865, %v1929
        %v1931 = vpop.f32.mrf.mxu0
        %1932 = vmatprep.mubr.bf16.mxu0 %v1302
        %1933 = vmatmul.mubr.bf16.gmra.mxu0 %v1301
        %v1934 = vpop.f32.mrf.mxu0
        %v1935 = vadd.f32 %v1870, %v1934
        %v1936 = vpop.f32.mrf.mxu0
        %v1937 = vpop.f32.mrf.mxu0
        %v1938 = vadd.f32 %v1873, %v1937
        %v1939 = vpop.f32.mrf.mxu0
        %1940 = vmatprep.mubr.bf16.mxu0 %v1308
        %1941 = vmatmul.mubr.bf16.gmra.mxu0 %v1307
        %v1942 = vpop.f32.mrf.mxu0
        %v1943 = vadd.f32 %v1878, %v1942
        %v1944 = vpop.f32.mrf.mxu0
        %v1945 = vpop.f32.mrf.mxu0
        %v1946 = vadd.f32 %v1881, %v1945
        %v1947 = vpop.f32.mrf.mxu0
        %1948 = vmatprep.mubr.bf16.mxu0 %v1314
        %1949 = vmatmul.mubr.bf16.gmra.mxu0 %v1313
        %v1950 = vpop.f32.mrf.mxu0
        %v1951 = vadd.f32 %v1886, %v1950
        %v1952 = vpop.f32.mrf.mxu0
        %v1953 = vpop.f32.mrf.mxu0
        %v1954 = vadd.f32 %v1889, %v1953
        %v1955 = vpop.f32.mrf.mxu0
        %1956 = vdwg.mxu0
        %1957 = vmatprep.subr.bf16.mxu0 0
        %1958 = vmatpush1.bf16.msra.mxu0 %v1706
        %1959 = vmatprep.subr.bf16.mxu0 0
        %1960 = vmatpush1.bf16.msra.mxu0 %v1705
        %1961 = vmatprep.subr.bf16.mxu0 0
        %1962 = vmatpush1.bf16.msra.mxu0 %v1704
        %1963 = vmatprep.subr.bf16.mxu0 0
        %1964 = vmatpush1.bf16.msra.mxu0 %v1703
        %1965 = vmatprep.subr.bf16.mxu0 0
        %1966 = vmatpush1.bf16.msra.mxu0 %v1702
        %1967 = vmatprep.subr.bf16.mxu0 0
        %1968 = vmatpush1.bf16.msra.mxu0 %v1701
        %1969 = vmatprep.subr.bf16.mxu0 0
        %1970 = vmatpush1.bf16.msra.mxu0 %v1700
        %1971 = vmatprep.subr.bf16.mxu0 0
        %1972 = vmatpush1.bf16.msra.mxu0 %v1699
        %1973 = vmatprep.subr.bf16.mxu0 0
        %1974 = vmatpush2.bf16.msra.mxu0 %v1714
        %1975 = vmatprep.subr.bf16.mxu0 0
        %1976 = vmatpush2.bf16.msra.mxu0 %v1713
        %1977 = vmatprep.subr.bf16.mxu0 0
        %1978 = vmatpush2.bf16.msra.mxu0 %v1712
        %1979 = vmatprep.subr.bf16.mxu0 0
        %1980 = vmatpush2.bf16.msra.mxu0 %v1711
        %1981 = vmatprep.subr.bf16.mxu0 0
        %1982 = vmatpush2.bf16.msra.mxu0 %v1710
        %1983 = vmatprep.subr.bf16.mxu0 0
        %1984 = vmatpush2.bf16.msra.mxu0 %v1709
        %1985 = vmatprep.subr.bf16.mxu0 0
        %1986 = vmatpush2.bf16.msra.mxu0 %v1708
        %1987 = vmatprep.subr.bf16.mxu0 0
        %1988 = vmatpush2.bf16.msra.mxu0 %v1707
        %1989 = vmatprep.mubr.bf16.mxu0 %v1298
        %1990 = vmatmul.mubr.bf16.gmra.mxu0 %v1297
        %v1991 = vpop.f32.mrf.mxu0
        %v1992 = vadd.f32 %v1927, %v1991
        %v1993 = vpop.f32.mrf.mxu0
        %v1994 = vpop.f32.mrf.mxu0
        %v1995 = vadd.f32 %v1930, %v1994
        %v1996 = vpop.f32.mrf.mxu0
        %1997 = vmatprep.mubr.bf16.mxu0 %v1304
        %1998 = vmatmul.mubr.bf16.gmra.mxu0 %v1303
        %v1999 = vpop.f32.mrf.mxu0
        %v2000 = vadd.f32 %v1935, %v1999
        %v2001 = vpop.f32.mrf.mxu0
        %v2002 = vpop.f32.mrf.mxu0
        %v2003 = vadd.f32 %v1938, %v2002
        %v2004 = vpop.f32.mrf.mxu0
        %2005 = vmatprep.mubr.bf16.mxu0 %v1310
        %2006 = vmatmul.mubr.bf16.gmra.mxu0 %v1309
        %v2007 = vpop.f32.mrf.mxu0
        %v2008 = vadd.f32 %v1943, %v2007
        %v2009 = vpop.f32.mrf.mxu0
        %v2010 = vpop.f32.mrf.mxu0
        %v2011 = vadd.f32 %v1946, %v2010
        %v2012 = vpop.f32.mrf.mxu0
        %2013 = vmatprep.mubr.bf16.mxu0 %v1316
        %2014 = vmatmul.mubr.bf16.gmra.mxu0 %v1315
        %v2015 = vpop.f32.mrf.mxu0
        %v2016 = vadd.f32 %v1951, %v2015
        %v2017 = vpop.f32.mrf.mxu0
        %v2018 = vpop.f32.mrf.mxu0
        %v2019 = vadd.f32 %v1954, %v2018
        %v2020 = vpop.f32.mrf.mxu0
        %2021 = vdwg.mxu0
        %2022 = vmatprep.subr.bf16.mxu0 0
        %2023 = vmatpush1.bf16.msra.mxu0 %v1722
        %2024 = vmatprep.subr.bf16.mxu0 0
        %2025 = vmatpush1.bf16.msra.mxu0 %v1721
        %2026 = vmatprep.subr.bf16.mxu0 0
        %2027 = vmatpush1.bf16.msra.mxu0 %v1720
        %2028 = vmatprep.subr.bf16.mxu0 0
        %2029 = vmatpush1.bf16.msra.mxu0 %v1719
        %2030 = vmatprep.subr.bf16.mxu0 0
        %2031 = vmatpush1.bf16.msra.mxu0 %v1718
        %2032 = vmatprep.subr.bf16.mxu0 0
        %2033 = vmatpush1.bf16.msra.mxu0 %v1717
        %2034 = vmatprep.subr.bf16.mxu0 0
        %2035 = vmatpush1.bf16.msra.mxu0 %v1716
        %2036 = vmatprep.subr.bf16.mxu0 0
        %2037 = vmatpush1.bf16.msra.mxu0 %v1715
        %2038 = vmatprep.subr.bf16.mxu0 0
        %2039 = vmatpush2.bf16.msra.mxu0 %v1730
        %2040 = vmatprep.subr.bf16.mxu0 0
        %2041 = vmatpush2.bf16.msra.mxu0 %v1729
        %2042 = vmatprep.subr.bf16.mxu0 0
        %2043 = vmatpush2.bf16.msra.mxu0 %v1728
        %2044 = vmatprep.subr.bf16.mxu0 0
        %2045 = vmatpush2.bf16.msra.mxu0 %v1727
        %2046 = vmatprep.subr.bf16.mxu0 0
        %2047 = vmatpush2.bf16.msra.mxu0 %v1726
        %2048 = vmatprep.subr.bf16.mxu0 0
        %2049 = vmatpush2.bf16.msra.mxu0 %v1725
        %2050 = vmatprep.subr.bf16.mxu0 0
        %2051 = vmatpush2.bf16.msra.mxu0 %v1724
        %2052 = vmatprep.subr.bf16.mxu0 0
        %2053 = vmatpush2.bf16.msra.mxu0 %v1723
        %2054 = vmatprep.mubr.bf16.mxu0 %v1300
        %2055 = vmatmul.mubr.bf16.gmra.mxu0 %v1299
        %v2056 = vpop.f32.mrf.mxu0
        %v2057 = vadd.f32 %v1992, %v2056
        %v2058 = vpop.f32.mrf.mxu0
        %v2059 = vpop.f32.mrf.mxu0
        %v2060 = vadd.f32 %v1995, %v2059
        %v2061 = vpop.f32.mrf.mxu0
        %2062 = vmatprep.mubr.bf16.mxu0 %v1306
        %2063 = vmatmul.mubr.bf16.gmra.mxu0 %v1305
        %v2064 = vpop.f32.mrf.mxu0
        %v2065 = vadd.f32 %v2000, %v2064
        %v2066 = vpop.f32.mrf.mxu0
        %v2067 = vpop.f32.mrf.mxu0
        %v2068 = vadd.f32 %v2003, %v2067
        %v2069 = vpop.f32.mrf.mxu0
        %2070 = vmatprep.mubr.bf16.mxu0 %v1312
        %2071 = vmatmul.mubr.bf16.gmra.mxu0 %v1311
        %v2072 = vpop.f32.mrf.mxu0
        %v2073 = vadd.f32 %v2008, %v2072
        %v2074 = vpop.f32.mrf.mxu0
        %v2075 = vpop.f32.mrf.mxu0
        %v2076 = vadd.f32 %v2011, %v2075
        %v2077 = vpop.f32.mrf.mxu0
        %2078 = vmatprep.mubr.bf16.mxu0 %v1318
        %2079 = vmatmul.mubr.bf16.gmra.mxu0 %v1317
        %v2080 = vpop.f32.mrf.mxu0
        %v2081 = vadd.f32 %v2016, %v2080
        %v2082 = vpop.f32.mrf.mxu0
        %v2083 = vpop.f32.mrf.mxu0
        %v2084 = vadd.f32 %v2019, %v2083
        %v2085 = vpop.f32.mrf.mxu0
        %2086 = vdwg.mxu0
        %2087 = vmatprep.subr.bf16.mxu0 0
        %2088 = vmatpush1.bf16.msra.mxu0 %v1738
        %2089 = vmatprep.subr.bf16.mxu0 0
        %2090 = vmatpush1.bf16.msra.mxu0 %v1737
        %2091 = vmatprep.subr.bf16.mxu0 0
        %2092 = vmatpush1.bf16.msra.mxu0 %v1736
        %2093 = vmatprep.subr.bf16.mxu0 0
        %2094 = vmatpush1.bf16.msra.mxu0 %v1735
        %2095 = vmatprep.subr.bf16.mxu0 0
        %2096 = vmatpush1.bf16.msra.mxu0 %v1734
        %2097 = vmatprep.subr.bf16.mxu0 0
        %2098 = vmatpush1.bf16.msra.mxu0 %v1733
        %2099 = vmatprep.subr.bf16.mxu0 0
        %2100 = vmatpush1.bf16.msra.mxu0 %v1732
        %2101 = vmatprep.subr.bf16.mxu0 0
        %2102 = vmatpush1.bf16.msra.mxu0 %v1731
        %2103 = vmatprep.subr.bf16.mxu0 0
        %2104 = vmatpush2.bf16.msra.mxu0 %v1746
        %2105 = vmatprep.subr.bf16.mxu0 0
        %2106 = vmatpush2.bf16.msra.mxu0 %v1745
        %2107 = vmatprep.subr.bf16.mxu0 0
        %2108 = vmatpush2.bf16.msra.mxu0 %v1744
        %2109 = vmatprep.subr.bf16.mxu0 0
        %2110 = vmatpush2.bf16.msra.mxu0 %v1743
        %2111 = vmatprep.subr.bf16.mxu0 0
        %2112 = vmatpush2.bf16.msra.mxu0 %v1742
        %2113 = vmatprep.subr.bf16.mxu0 0
        %2114 = vmatpush2.bf16.msra.mxu0 %v1741
        %2115 = vmatprep.subr.bf16.mxu0 0
        %2116 = vmatpush2.bf16.msra.mxu0 %v1740
        %2117 = vmatprep.subr.bf16.mxu0 0
        %2118 = vmatpush2.bf16.msra.mxu0 %v1739
        %2119 = vmatprep.mubr.bf16.mxu0 %v539
        %2120 = vmatmul.mubr.bf16.gmra.mxu0 %v1301
        %v2121 = vpop.f32.mrf.mxu0
        %v2122 = vadd.f32 %v2057, %v2121
        %v2123 = vpop.f32.mrf.mxu0
        %v2124 = vpop.f32.mrf.mxu0
        %v2125 = vadd.f32 %v2060, %v2124
        %v2126 = vpop.f32.mrf.mxu0
        %2127 = vmatprep.mubr.bf16.mxu0 %v543
        %2128 = vmatmul.mubr.bf16.gmra.mxu0 %v1307
        %v2129 = vpop.f32.mrf.mxu0
        %v2130 = vadd.f32 %v2065, %v2129
        %v2131 = vpop.f32.mrf.mxu0
        %v2132 = vpop.f32.mrf.mxu0
        %v2133 = vadd.f32 %v2068, %v2132
        %v2134 = vpop.f32.mrf.mxu0
        %2135 = vmatprep.mubr.bf16.mxu0 %v547
        %2136 = vmatmul.mubr.bf16.gmra.mxu0 %v1313
        %v2137 = vpop.f32.mrf.mxu0
        %v2138 = vadd.f32 %v2073, %v2137
        %v2139 = vpop.f32.mrf.mxu0
        %v2140 = vpop.f32.mrf.mxu0
        %v2141 = vadd.f32 %v2076, %v2140
        %v2142 = vpop.f32.mrf.mxu0
        %2143 = vmatprep.mubr.bf16.mxu0 %v551
        %2144 = vmatmul.mubr.bf16.gmra.mxu0 %v1319
        %v2145 = vpop.f32.mrf.mxu0
        %v2146 = vadd.f32 %v2081, %v2145
        %v2147 = vpop.f32.mrf.mxu0
        %v2148 = vpop.f32.mrf.mxu0
        %v2149 = vadd.f32 %v2084, %v2148
        %v2150 = vpop.f32.mrf.mxu0
        %2151 = vdwg.mxu0
        %v2152 = vmax.f32 %v2122, 0.0
        %v2153 = vmax.f32 %v2125, 0.0
        %v2154 = vmax.f32 %v2130, 0.0
        %v2155 = vmax.f32 %v2133, 0.0
        %v2156 = vmax.f32 %v2138, 0.0
        %v2157 = vmax.f32 %v2141, 0.0
        %v2158 = vmax.f32 %v2146, 0.0
        %v2159 = vmax.f32 %v2149, 0.0
        %2160 = vst [vmem:[%s217] sm:$0xff] %v2152
        %2161 = vst [vmem:[%s217 + $0x8] sm:$0xff] %v2153
        %2162 = vst [vmem:[%s217 + $0x10] sm:$0xff] %v2154
        %2163 = vst [vmem:[%s217 + $0x18] sm:$0xff] %v2155
        %2164 = vst [vmem:[%s217 + $0x20] sm:$0xff] %v2156
        %2165 = vst [vmem:[%s217 + $0x28] sm:$0xff] %v2157
        %2166 = vst [vmem:[%s217 + $0x30] sm:$0xff] %v2158
        %2167 = vst [vmem:[%s217 + $0x38] sm:$0xff] %v2159
        %s2168 = sand.u32 %s137, 1
        %s2169 = scalar_lea.sflag [#allocation3], %s2168
        %s2170 = sand.u32 %s137, 1
        %s2171 = smul.addr %s2170, 64
        %s2172 = scalar_lea.vmem [#allocation2], %s2171
        // Predicated region
        $region41: #{_resblock_apply.1} parent=39 // pred_check
          %p2173 = pneg %p147
        $region42: #{_resblock_apply.1} parent=39 // pred_check_branch
          %2175 = sbr.rel (%p2173) target = $region44
        $region43: #{_resblock_apply.1} parent=39 // pred_region
          %s2177 = ssub.s32 1024, 1024
          %2178 = vsyncadd %s2169, %s2177
          %s2179 = smul.addr %s19, 8
          %s2180 = smul.addr %s2179, 128
          %s2181 = scalar_lea.hbm %s5, %s2180
          %s2182 = sshll.u32 %s2172, 4
          %s2183 = int_to_ptr.vmem [resolvable:$true] %s2182
          %2188 = dma.vmem_to_hbm [thread:$0]  %s2183, 1024, %s2181, %s2169, 128, 128, 8
        $region44: #{_resblock_apply.1} parent=39 // pred_fallthru
          _
      $region40: #{_resblock_apply.1} parent=5 // pred_fallthru
        _
      %p2189 = scmp.le.s32.totalorder 2, %s14
      // Predicated region
      $region45: #{_resblock_apply.1} parent=5 // pred_check
        %p2190 = pneg %p2189
      $region46: #{_resblock_apply.1} parent=5 // pred_check_branch
        %2192 = sbr.rel (%p2190) target = $region48
      $region47: #{_resblock_apply.1} parent=5 // pred_region
        %s2193 = ssub.s32 %s14, 2
        // Predicated region
        $region49: #{_resblock_apply.1} parent=47 // pred_check
          %p2194 = pneg %p153
        $region50: #{_resblock_apply.1} parent=47 // pred_check_branch
          %2196 = sbr.rel (%p2194) target = $region52
        $region51: #{_resblock_apply.1} parent=47 // pred_region
          %s2197 = sand.u32 %s138, 1
          %s2198 = scalar_lea.sflag [#allocation3], %s2197
          %s2199 = sand.u32 %s138, 1
          %s2200 = smul.addr %s2199, 64
          %s2201 = scalar_lea.vmem [#allocation2], %s2200
          %2202 = dma.done %s2198, 1024
        $region52: #{_resblock_apply.1} parent=47 // pred_fallthru
          _
      $region48: #{_resblock_apply.1} parent=5 // pred_fallthru
        _
    $region6: #{_resblock_apply.1} parent=1 // loop_footer
      %s18 = sadd.s32 1, %s14
    $region7: #{_resblock_apply.1} parent=1 // loop_footer_branch
      %13 = sbr.rel target = $region3
    $region8: #{_resblock_apply.1} parent=1 // loop_exit
      _
    %2203 = vsyncpa [#allocation3], 1
    %s2204 = scalar_lea.sflag [#allocation3], 1
    %2205 = vsyncpa %s2204, 1

</llo_original>
